<compile_context>
chip_gen: v7x
topology: tpu7x:2x2x1
jax: 0.10.0
libtpu: 0.0.40
codegen_flags: <defaults>
</compile_context>

<pallas_src>
import jax
import jax.numpy as jnp
from jax.experimental import pallas as pl
from jax.experimental.pallas import tpu as pltpu

BN_EPS = 1e-5
_VMEM_LIMIT = 32 * 1024 * 1024


def _pick_tile(n, target, multiple_of=1):
    """Largest divisor of n that is <= target and a multiple of `multiple_of`.
    Falls back to n itself (a full-extent block is always legal)."""
    best = None
    for t in range(1, min(n, max(1, target)) + 1):
        if n % t == 0 and t % multiple_of == 0:
            best = t
    return best if best is not None else n


def _row_block_map(n_ht):
    def index_map(n, h):
        return (n * n_ht + h, 0, 0)
    return index_map


# --------------------------------------------------------------------------------------
# Pass 1: conv3x3 + bias, plus per-tile per-channel (sum, sumsq) partials for global BN.
# --------------------------------------------------------------------------------------
def _conv_stats_kernel(x_ref, w_ref, b_ref, y_ref, stats_ref):
    # x_ref:     (1, H+2, W+2, Cin)  bf16  whole zero-padded sample (resident across h-tiles)
    # w_ref:     (3, 3, Cin, Cout)   bf16
    # b_ref:     (1, Cout)           f32
    # y_ref:     (tile_h, W, Cout)   f32   conv + bias output tile
    # stats_ref: (1, 2, Cout)        f32   [sum, sum-of-squares] partials for this tile
    tile_h, W, cout = y_ref.shape
    row0 = pl.multiple_of(pl.program_id(1) * tile_h, tile_h)

    w = w_ref[...]                                            # tiny, hoisted once per tile
    acc = jnp.zeros((tile_h, W, cout), jnp.float32)
    for dy in range(3):
        # Only the rows this tap needs: dynamic (pl.ds) slice on the major row axis.
        x_rows = x_ref[0, pl.ds(row0 + dy, tile_h), :, :]     # (tile_h, W+2, Cin) bf16
        for dx in range(3):
            xt = x_rows[:, dx:dx + W, :]                      # (tile_h, W, Cin)
            acc = acc + jnp.einsum("hwi,io->hwo", xt, w[dy, dx],
                                   preferred_element_type=jnp.float32)
    acc = acc + b_ref[...].reshape(1, 1, cout)

    # One-pass per-channel partial statistics (f32 accumulation).
    s_sum = jnp.sum(acc, axis=(0, 1), keepdims=True)          # (1, 1, Cout)
    s_sq = jnp.sum(acc * acc, axis=(0, 1), keepdims=True)     # (1, 1, Cout)
    stats_ref[0, 0:1, :] = s_sum[0]
    stats_ref[0, 1:2, :] = s_sq[0]

    y_ref[...] = acc


# --------------------------------------------------------------------------------------
# Pass 2: normalize + (residual) + ReLU, streaming in a lane-dense (rows, W*Cout) layout.
# --------------------------------------------------------------------------------------
def _bn_res_relu_kernel(y_ref, scale_ref, shift_ref, res_ref, out_ref):
    y = y_ref[...] * scale_ref[...] + shift_ref[...] + res_ref[...]
    out_ref[...] = jnp.maximum(y, 0.0).astype(out_ref.dtype)


def _bn_relu_kernel(y_ref, scale_ref, shift_ref, out_ref):
    y = y_ref[...] * scale_ref[...] + shift_ref[...]
    out_ref[...] = jnp.maximum(y, 0.0).astype(out_ref.dtype)


def cnn_unit_forward(x_nchw, w_oihw, bias, gamma, beta, res_nchw=None):
    """Pallas implementation of CNNUnit.forward (NCHW in / NCHW out, like PyTorch)."""
    N, Cin, H, W = x_nchw.shape
    Cout = w_oihw.shape[0]

    # Layout / dtype prep. Conv inputs go to bf16 (f32 accumulation inside the kernel);
    # the halo pad fuses with the NCHW->NHWC transpose copy.
    x = jnp.transpose(x_nchw, (0, 2, 3, 1)).astype(jnp.bfloat16)          # NHWC
    xpad = jnp.pad(x, ((0, 0), (1, 1), (1, 1), (0, 0)))
    w = jnp.transpose(w_oihw, (2, 3, 1, 0)).astype(jnp.bfloat16)          # (3,3,Cin,Cout)
    b = bias.reshape(1, Cout).astype(jnp.float32)

    # ---------------- pass 1: conv + bias + stat partials ----------------
    tile_h = _pick_tile(H, min(max(1, (1 << 20) // max(1, W * Cout * 4)),
                               max(1, H // 2)))
    n_ht = H // tile_h

    y3, stats = pl.pallas_call(
        _conv_stats_kernel,
        grid=(N, n_ht),
        in_specs=[
            pl.BlockSpec((1, H + 2, W + 2, Cin), lambda n, h: (n, 0, 0, 0)),
            pl.BlockSpec((3, 3, Cin, Cout), lambda n, h: (0, 0, 0, 0)),
            pl.BlockSpec((1, Cout), lambda n, h: (0, 0)),
        ],
        out_specs=[
            pl.BlockSpec((tile_h, W, Cout), _row_block_map(n_ht)),
            pl.BlockSpec((1, 2, Cout), _row_block_map(n_ht)),
        ],
        out_shape=[
            jax.ShapeDtypeStruct((N * H, W, Cout), jnp.float32),
            jax.ShapeDtypeStruct((N * n_ht, 2, Cout), jnp.float32),
        ],
        compiler_params=pltpu.CompilerParams(
            dimension_semantics=("parallel", "parallel"),
            vmem_limit_bytes=_VMEM_LIMIT),
    )(xpad, w, b)

    # -------- global training-mode BN stats (tiny reduction + folding, in XLA) --------
    count = float(N * H * W)
    s = jnp.sum(stats, axis=0)                                   # (2, Cout)
    mean = s[0] / count
    var = jnp.maximum(s[1] / count - mean * mean, 0.0)           # biased variance, f32
    inv = jax.lax.rsqrt(var + BN_EPS)
    scale = gamma.astype(jnp.float32) * inv                      # (Cout,)
    shift = beta.astype(jnp.float32) - mean * scale              # (Cout,)

    # ------------- pass 2: normalize + residual + ReLU (lane-dense streaming) ---------
    R = N * H
    C = W * Cout
    y2 = y3.reshape(R, C)                                        # contiguous -> free
    scale_row = jnp.tile(scale, (W,)).reshape(1, C)              # per-channel, pre-tiled
    shift_row = jnp.tile(shift, (W,)).reshape(1, C)

    tile_r = _pick_tile(R, min(max(8, (2 << 20) // max(1, C * 4)),
                               max(8, R // 4)), multiple_of=8)

    row_spec = pl.BlockSpec((tile_r, C), lambda i: (i, 0))
    chan_spec = pl.BlockSpec((1, C), lambda i: (0, 0))

    if res_nchw is not None:
        res2 = jnp.transpose(res_nchw, (0, 2, 3, 1)).astype(jnp.float32).reshape(R, C)
        kernel2 = _bn_res_relu_kernel
        operands = (y2, scale_row, shift_row, res2)
        in_specs2 = [row_spec, chan_spec, chan_spec, row_spec]
    else:
        # Residual-less variant: no zeros tensor is streamed from HBM.
        kernel2 = _bn_relu_kernel
        operands = (y2, scale_row, shift_row)
        in_specs2 = [row_spec, chan_spec, chan_spec]

    out2 = pl.pallas_call(
        kernel2,
        grid=(R // tile_r,),
        in_specs=in_specs2,
        out_specs=row_spec,
        out_shape=jax.ShapeDtypeStruct((R, C), jnp.float32),
        compiler_params=pltpu.CompilerParams(
            dimension_semantics=("parallel",),
            vmem_limit_bytes=_VMEM_LIMIT),
    )(*operands)

    # TODO(synk): nn.BatchNorm2d also updates running_mean/running_var as a training-time
    # side effect; that mutable module state has no place in this functional forward pass.
    return jnp.transpose(out2.reshape(N, H, W, Cout), (0, 3, 1, 2))


def cnn_unit_reference(x_nchw, w_oihw, bias, gamma, beta, res_nchw=None):
    """Plain-JAX reference of the PyTorch forward (training-mode BN). Conv inputs are
    cast to bf16 exactly like the kernel so the comparison isolates kernel logic."""
    y = jax.lax.conv_general_dilated(
        x_nchw.astype(jnp.bfloat16), w_oihw.astype(jnp.bfloat16),
        window_strides=(1, 1), padding="SAME",
        dimension_numbers=("NCHW", "OIHW", "NCHW"),
        preferred_element_type=jnp.float32)
    y = y + bias.reshape(1, -1, 1, 1)
    mean = jnp.mean(y, axis=(0, 2, 3), keepdims=True)
    var = jnp.mean((y - mean) ** 2, axis=(0, 2, 3), keepdims=True)
    y = (y - mean) / jnp.sqrt(var + BN_EPS)
    y = y * gamma.reshape(1, -1, 1, 1) + beta.reshape(1, -1, 1, 1)
    if res_nchw is not None:
        y = y + res_nchw
    return jnp.maximum(y, 0.0)


if __name__ == "__main__":
    # Shapes consistent with CNNUnit(in_channels=4, out_channels=8).
    N, Cin, Cout, H, W = 2, 4, 8, 16, 16

    key = jax.random.PRNGKey(0)
    k_x, k_w, k_b, k_res = jax.random.split(key, 4)

    x = jax.random.normal(k_x, (N, Cin, H, W), jnp.float32)
    bound = 1.0 / (Cin * 3 * 3) ** 0.5      # PyTorch Conv2d default init bound
    w = jax.random.uniform(k_w, (Cout, Cin, 3, 3), jnp.float32, -bound, bound)
    bias = jax.random.uniform(k_b, (Cout,), jnp.float32, -bound, bound)
    gamma = jnp.ones((Cout,), jnp.float32)  # BatchNorm2d default affine init
    beta = jnp.zeros((Cout,), jnp.float32)
    res = jax.random.normal(k_res, (N, Cout, H, W), jnp.float32)

    fwd = jax.jit(cnn_unit_forward)

    # With residual.
    out = jax.block_until_ready(fwd(x, w, bias, gamma, beta, res))
    ref = jax.block_until_ready(cnn_unit_reference(x, w, bias, gamma, beta, res))
    assert out.shape == (N, Cout, H, W)
    assert jnp.allclose(out, ref, atol=1e-3, rtol=1e-3), \
        float(jnp.max(jnp.abs(out - ref)))

    # Without residual (separate kernel variant, no zeros streamed).
    out_nr = jax.block_until_ready(fwd(x, w, bias, gamma, beta))
    ref_nr = jax.block_until_ready(cnn_unit_reference(x, w, bias, gamma, beta))
    assert jnp.allclose(out_nr, ref_nr, atol=1e-3, rtol=1e-3), \
        float(jnp.max(jnp.abs(out_nr - ref_nr)))

    print("KERNEL_OK")
</pallas_src>

<mosaic_0001>
module attributes {stable_mosaic.version = 11 : i64} {
  func.func @_conv_stats_kernel(%arg0: i32, %arg1: i32, %arg2: memref<1x18x18x4xbf16, #tpu.memory_space<vmem>>, %arg3: memref<3x3x4x8xbf16, #tpu.memory_space<vmem>>, %arg4: memref<1x8xf32, #tpu.memory_space<vmem>>, %arg5: memref<8x16x8xf32, #tpu.memory_space<vmem>>, %arg6: memref<1x2x8xf32, #tpu.memory_space<vmem>>) attributes {dimension_semantics = [#tpu.dimension_semantics<parallel>, #tpu.dimension_semantics<parallel>], iteration_bounds = array<i64: 2, 2>, scalar_prefetch = 0 : i64, scratch_operands = 0 : i64, tpu.core_type = #tpu.core_type<tc>, window_params = [{transform_indices = @transform_0, window_bounds = array<i64: 1, 18, 18, 4>}, {pipeline_mode = #tpu.pipeline_mode<synchronous>, transform_indices = @transform_1, window_bounds = array<i64: 3, 3, 4, 8>}, {pipeline_mode = #tpu.pipeline_mode<synchronous>, transform_indices = @transform_2, window_bounds = array<i64: 1, 8>}, {transform_indices = @transform_3, window_bounds = array<i64: 8, 16, 8>}, {transform_indices = @transform_4, window_bounds = array<i64: 1, 2, 8>}]} {
    %c8_i32 = arith.constant 8 : i32
    %0 = arith.muli %arg1, %c8_i32 : i32
    %1 = tpu.assume_multiple %0, 8 : i32
    %c0 = arith.constant 0 : index
    %c0_0 = arith.constant 0 : index
    %c0_1 = arith.constant 0 : index
    %c0_2 = arith.constant 0 : index
    %2 = vector.load %arg3[%c0, %c0_0, %c0_1, %c0_2] : memref<3x3x4x8xbf16, #tpu.memory_space<vmem>>, vector<3x3x4x8xbf16>
    %cst = arith.constant 0.000000e+00 : f32
    %3 = vector.broadcast %cst : f32 to vector<8x16x8xf32>
    %c0_i32 = arith.constant 0 : i32
    %4 = arith.addi %1, %c0_i32 : i32
    %c0_3 = arith.constant 0 : index
    %5 = arith.index_cast %4 : i32 to index
    %c0_4 = arith.constant 0 : index
    %c0_5 = arith.constant 0 : index
    %6 = vector.load %arg2[%c0_3, %5, %c0_4, %c0_5] : memref<1x18x18x4xbf16, #tpu.memory_space<vmem>>, vector<1x8x18x4xbf16>
    %7 = vector.shape_cast %6 : vector<1x8x18x4xbf16> to vector<8x18x4xbf16>
    %8 = vector.extract_strided_slice %7 {offsets = [0, 0, 0], sizes = [8, 16, 4], strides = [1, 1, 1]} : vector<8x18x4xbf16> to vector<8x16x4xbf16>
    %9 = vector.extract_strided_slice %2 {offsets = [0, 0, 0, 0], sizes = [1, 1, 4, 8], strides = [1, 1, 1, 1]} : vector<3x3x4x8xbf16> to vector<1x1x4x8xbf16>
    %10 = vector.shape_cast %9 : vector<1x1x4x8xbf16> to vector<4x8xbf16>
    "tpu.trace_start"() <{level = 10 : i32, message = "hwi,io->hwo"}> : () -> ()
    %cst_6 = arith.constant dense<0.000000e+00> : vector<8x16x8xf32>
    %11 = tpu.matmul %8, %10, %cst_6 {dimension_numbers = #tpu.dot_dimension_numbers<[2], [0], [0, 1], [1], [0, 0, 0, 1, 1, 1], [], []>} : vector<8x16x4xbf16>, vector<4x8xbf16>, vector<8x16x8xf32> -> vector<8x16x8xf32>
    "tpu.trace_stop"() : () -> ()
    %12 = arith.addf %3, %11 : vector<8x16x8xf32>
    %13 = vector.extract_strided_slice %7 {offsets = [0, 1, 0], sizes = [8, 16, 4], strides = [1, 1, 1]} : vector<8x18x4xbf16> to vector<8x16x4xbf16>
    %14 = vector.extract_strided_slice %2 {offsets = [0, 1, 0, 0], sizes = [1, 1, 4, 8], strides = [1, 1, 1, 1]} : vector<3x3x4x8xbf16> to vector<1x1x4x8xbf16>
    %15 = vector.shape_cast %14 : vector<1x1x4x8xbf16> to vector<4x8xbf16>
    "tpu.trace_start"() <{level = 10 : i32, message = "hwi,io->hwo"}> : () -> ()
    %cst_7 = arith.constant dense<0.000000e+00> : vector<8x16x8xf32>
    %16 = tpu.matmul %13, %15, %cst_7 {dimension_numbers = #tpu.dot_dimension_numbers<[2], [0], [0, 1], [1], [0, 0, 0, 1, 1, 1], [], []>} : vector<8x16x4xbf16>, vector<4x8xbf16>, vector<8x16x8xf32> -> vector<8x16x8xf32>
    "tpu.trace_stop"() : () -> ()
    %17 = arith.addf %12, %16 : vector<8x16x8xf32>
    %18 = vector.extract_strided_slice %7 {offsets = [0, 2, 0], sizes = [8, 16, 4], strides = [1, 1, 1]} : vector<8x18x4xbf16> to vector<8x16x4xbf16>
    %19 = vector.extract_strided_slice %2 {offsets = [0, 2, 0, 0], sizes = [1, 1, 4, 8], strides = [1, 1, 1, 1]} : vector<3x3x4x8xbf16> to vector<1x1x4x8xbf16>
    %20 = vector.shape_cast %19 : vector<1x1x4x8xbf16> to vector<4x8xbf16>
    "tpu.trace_start"() <{level = 10 : i32, message = "hwi,io->hwo"}> : () -> ()
    %cst_8 = arith.constant dense<0.000000e+00> : vector<8x16x8xf32>
    %21 = tpu.matmul %18, %20, %cst_8 {dimension_numbers = #tpu.dot_dimension_numbers<[2], [0], [0, 1], [1], [0, 0, 0, 1, 1, 1], [], []>} : vector<8x16x4xbf16>, vector<4x8xbf16>, vector<8x16x8xf32> -> vector<8x16x8xf32>
    "tpu.trace_stop"() : () -> ()
    %22 = arith.addf %17, %21 : vector<8x16x8xf32>
    %c1_i32 = arith.constant 1 : i32
    %23 = arith.addi %1, %c1_i32 : i32
    %c0_9 = arith.constant 0 : index
    %24 = arith.index_cast %23 : i32 to index
    %c0_10 = arith.constant 0 : index
    %c0_11 = arith.constant 0 : index
    %25 = vector.load %arg2[%c0_9, %24, %c0_10, %c0_11] : memref<1x18x18x4xbf16, #tpu.memory_space<vmem>>, vector<1x8x18x4xbf16>
    %26 = vector.shape_cast %25 : vector<1x8x18x4xbf16> to vector<8x18x4xbf16>
    %27 = vector.extract_strided_slice %26 {offsets = [0, 0, 0], sizes = [8, 16, 4], strides = [1, 1, 1]} : vector<8x18x4xbf16> to vector<8x16x4xbf16>
    %28 = vector.extract_strided_slice %2 {offsets = [1, 0, 0, 0], sizes = [1, 1, 4, 8], strides = [1, 1, 1, 1]} : vector<3x3x4x8xbf16> to vector<1x1x4x8xbf16>
    %29 = vector.shape_cast %28 : vector<1x1x4x8xbf16> to vector<4x8xbf16>
    "tpu.trace_start"() <{level = 10 : i32, message = "hwi,io->hwo"}> : () -> ()
    %cst_12 = arith.constant dense<0.000000e+00> : vector<8x16x8xf32>
    %30 = tpu.matmul %27, %29, %cst_12 {dimension_numbers = #tpu.dot_dimension_numbers<[2], [0], [0, 1], [1], [0, 0, 0, 1, 1, 1], [], []>} : vector<8x16x4xbf16>, vector<4x8xbf16>, vector<8x16x8xf32> -> vector<8x16x8xf32>
    "tpu.trace_stop"() : () -> ()
    %31 = arith.addf %22, %30 : vector<8x16x8xf32>
    %32 = vector.extract_strided_slice %26 {offsets = [0, 1, 0], sizes = [8, 16, 4], strides = [1, 1, 1]} : vector<8x18x4xbf16> to vector<8x16x4xbf16>
    %33 = vector.extract_strided_slice %2 {offsets = [1, 1, 0, 0], sizes = [1, 1, 4, 8], strides = [1, 1, 1, 1]} : vector<3x3x4x8xbf16> to vector<1x1x4x8xbf16>
    %34 = vector.shape_cast %33 : vector<1x1x4x8xbf16> to vector<4x8xbf16>
    "tpu.trace_start"() <{level = 10 : i32, message = "hwi,io->hwo"}> : () -> ()
    %cst_13 = arith.constant dense<0.000000e+00> : vector<8x16x8xf32>
    %35 = tpu.matmul %32, %34, %cst_13 {dimension_numbers = #tpu.dot_dimension_numbers<[2], [0], [0, 1], [1], [0, 0, 0, 1, 1, 1], [], []>} : vector<8x16x4xbf16>, vector<4x8xbf16>, vector<8x16x8xf32> -> vector<8x16x8xf32>
    "tpu.trace_stop"() : () -> ()
    %36 = arith.addf %31, %35 : vector<8x16x8xf32>
    %37 = vector.extract_strided_slice %26 {offsets = [0, 2, 0], sizes = [8, 16, 4], strides = [1, 1, 1]} : vector<8x18x4xbf16> to vector<8x16x4xbf16>
    %38 = vector.extract_strided_slice %2 {offsets = [1, 2, 0, 0], sizes = [1, 1, 4, 8], strides = [1, 1, 1, 1]} : vector<3x3x4x8xbf16> to vector<1x1x4x8xbf16>
    %39 = vector.shape_cast %38 : vector<1x1x4x8xbf16> to vector<4x8xbf16>
    "tpu.trace_start"() <{level = 10 : i32, message = "hwi,io->hwo"}> : () -> ()
    %cst_14 = arith.constant dense<0.000000e+00> : vector<8x16x8xf32>
    %40 = tpu.matmul %37, %39, %cst_14 {dimension_numbers = #tpu.dot_dimension_numbers<[2], [0], [0, 1], [1], [0, 0, 0, 1, 1, 1], [], []>} : vector<8x16x4xbf16>, vector<4x8xbf16>, vector<8x16x8xf32> -> vector<8x16x8xf32>
    "tpu.trace_stop"() : () -> ()
    %41 = arith.addf %36, %40 : vector<8x16x8xf32>
    %c2_i32 = arith.constant 2 : i32
    %42 = arith.addi %1, %c2_i32 : i32
    %c0_15 = arith.constant 0 : index
    %43 = arith.index_cast %42 : i32 to index
    %c0_16 = arith.constant 0 : index
    %c0_17 = arith.constant 0 : index
    %44 = vector.load %arg2[%c0_15, %43, %c0_16, %c0_17] : memref<1x18x18x4xbf16, #tpu.memory_space<vmem>>, vector<1x8x18x4xbf16>
    %45 = vector.shape_cast %44 : vector<1x8x18x4xbf16> to vector<8x18x4xbf16>
    %46 = vector.extract_strided_slice %45 {offsets = [0, 0, 0], sizes = [8, 16, 4], strides = [1, 1, 1]} : vector<8x18x4xbf16> to vector<8x16x4xbf16>
    %47 = vector.extract_strided_slice %2 {offsets = [2, 0, 0, 0], sizes = [1, 1, 4, 8], strides = [1, 1, 1, 1]} : vector<3x3x4x8xbf16> to vector<1x1x4x8xbf16>
    %48 = vector.shape_cast %47 : vector<1x1x4x8xbf16> to vector<4x8xbf16>
    "tpu.trace_start"() <{level = 10 : i32, message = "hwi,io->hwo"}> : () -> ()
    %cst_18 = arith.constant dense<0.000000e+00> : vector<8x16x8xf32>
    %49 = tpu.matmul %46, %48, %cst_18 {dimension_numbers = #tpu.dot_dimension_numbers<[2], [0], [0, 1], [1], [0, 0, 0, 1, 1, 1], [], []>} : vector<8x16x4xbf16>, vector<4x8xbf16>, vector<8x16x8xf32> -> vector<8x16x8xf32>
    "tpu.trace_stop"() : () -> ()
    %50 = arith.addf %41, %49 : vector<8x16x8xf32>
    %51 = vector.extract_strided_slice %45 {offsets = [0, 1, 0], sizes = [8, 16, 4], strides = [1, 1, 1]} : vector<8x18x4xbf16> to vector<8x16x4xbf16>
    %52 = vector.extract_strided_slice %2 {offsets = [2, 1, 0, 0], sizes = [1, 1, 4, 8], strides = [1, 1, 1, 1]} : vector<3x3x4x8xbf16> to vector<1x1x4x8xbf16>
    %53 = vector.shape_cast %52 : vector<1x1x4x8xbf16> to vector<4x8xbf16>
    "tpu.trace_start"() <{level = 10 : i32, message = "hwi,io->hwo"}> : () -> ()
    %cst_19 = arith.constant dense<0.000000e+00> : vector<8x16x8xf32>
    %54 = tpu.matmul %51, %53, %cst_19 {dimension_numbers = #tpu.dot_dimension_numbers<[2], [0], [0, 1], [1], [0, 0, 0, 1, 1, 1], [], []>} : vector<8x16x4xbf16>, vector<4x8xbf16>, vector<8x16x8xf32> -> vector<8x16x8xf32>
    "tpu.trace_stop"() : () -> ()
    %55 = arith.addf %50, %54 : vector<8x16x8xf32>
    %56 = vector.extract_strided_slice %45 {offsets = [0, 2, 0], sizes = [8, 16, 4], strides = [1, 1, 1]} : vector<8x18x4xbf16> to vector<8x16x4xbf16>
    %57 = vector.extract_strided_slice %2 {offsets = [2, 2, 0, 0], sizes = [1, 1, 4, 8], strides = [1, 1, 1, 1]} : vector<3x3x4x8xbf16> to vector<1x1x4x8xbf16>
    %58 = vector.shape_cast %57 : vector<1x1x4x8xbf16> to vector<4x8xbf16>
    "tpu.trace_start"() <{level = 10 : i32, message = "hwi,io->hwo"}> : () -> ()
    %cst_20 = arith.constant dense<0.000000e+00> : vector<8x16x8xf32>
    %59 = tpu.matmul %56, %58, %cst_20 {dimension_numbers = #tpu.dot_dimension_numbers<[2], [0], [0, 1], [1], [0, 0, 0, 1, 1, 1], [], []>} : vector<8x16x4xbf16>, vector<4x8xbf16>, vector<8x16x8xf32> -> vector<8x16x8xf32>
    "tpu.trace_stop"() : () -> ()
    %60 = arith.addf %55, %59 : vector<8x16x8xf32>
    %c0_21 = arith.constant 0 : index
    %c0_22 = arith.constant 0 : index
    %61 = vector.load %arg4[%c0_21, %c0_22] : memref<1x8xf32, #tpu.memory_space<vmem>>, vector<1x8xf32>
    %62 = vector.shape_cast %61 : vector<1x8xf32> to vector<1x1x8xf32>
    %63 = vector.broadcast %62 : vector<1x1x8xf32> to vector<8x16x8xf32>
    %64 = arith.addf %60, %63 : vector<8x16x8xf32>
    %cst_23 = arith.constant dense<0.000000e+00> : vector<8xf32>
    %65 = vector.multi_reduction <add>, %64, %cst_23 [0, 1] : vector<8x16x8xf32> to vector<8xf32>
    %66 = vector.shape_cast %65 : vector<8xf32> to vector<1x1x8xf32>
    %67 = arith.mulf %64, %64 : vector<8x16x8xf32>
    %cst_24 = arith.constant dense<0.000000e+00> : vector<8xf32>
    %68 = vector.multi_reduction <add>, %67, %cst_24 [0, 1] : vector<8x16x8xf32> to vector<8xf32>
    %69 = vector.shape_cast %68 : vector<8xf32> to vector<1x1x8xf32>
    %70 = vector.shape_cast %66 : vector<1x1x8xf32> to vector<1x8xf32>
    %c0_25 = arith.constant 0 : index
    %c0_26 = arith.constant 0 : index
    %c0_27 = arith.constant 0 : index
    %71 = vector.load %arg6[%c0_25, %c0_26, %c0_27] : memref<1x2x8xf32, #tpu.memory_space<vmem>>, vector<1x1x8xf32>
    %72 = vector.shape_cast %71 : vector<1x1x8xf32> to vector<1x8xf32>
    %73 = vector.shape_cast %70 : vector<1x8xf32> to vector<1x1x8xf32>
    tpu.vector_store %arg6[%c0_25, %c0_26, %c0_27], %73 {strides = array<i32>} : memref<1x2x8xf32, #tpu.memory_space<vmem>>, vector<1x1x8xf32>,
    %74 = vector.shape_cast %69 : vector<1x1x8xf32> to vector<1x8xf32>
    %c0_28 = arith.constant 0 : index
    %c1 = arith.constant 1 : index
    %c0_29 = arith.constant 0 : index
    %75 = vector.load %arg6[%c0_28, %c1, %c0_29] : memref<1x2x8xf32, #tpu.memory_space<vmem>>, vector<1x1x8xf32>
    %76 = vector.shape_cast %75 : vector<1x1x8xf32> to vector<1x8xf32>
    %77 = vector.shape_cast %74 : vector<1x8xf32> to vector<1x1x8xf32>
    tpu.vector_store %arg6[%c0_28, %c1, %c0_29], %77 {strides = array<i32>} : memref<1x2x8xf32, #tpu.memory_space<vmem>>, vector<1x1x8xf32>,
    %c0_30 = arith.constant 0 : index
    %c0_31 = arith.constant 0 : index
    %c0_32 = arith.constant 0 : index
    %78 = vector.load %arg5[%c0_30, %c0_31, %c0_32] : memref<8x16x8xf32, #tpu.memory_space<vmem>>, vector<8x16x8xf32>
    tpu.vector_store %arg5[%c0_30, %c0_31, %c0_32], %64 {strides = array<i32>} : memref<8x16x8xf32, #tpu.memory_space<vmem>>, vector<8x16x8xf32>,
    return
  }
  func.func @transform_0(%arg0: i32, %arg1: i32) -> (i32, i32, i32, i32) {
    %c0_i32 = arith.constant 0 : i32
    %c0_i32_0 = arith.constant 0 : i32
    %c0_i32_1 = arith.constant 0 : i32
    %c0_i32_2 = arith.constant 0 : i32
    return %arg0, %c0_i32, %c0_i32_0, %c0_i32_1 : i32, i32, i32, i32
  }
  func.func @transform_1(%arg0: i32, %arg1: i32) -> (i32, i32, i32, i32) {
    %c0_i32 = arith.constant 0 : i32
    %c0_i32_0 = arith.constant 0 : i32
    %c0_i32_1 = arith.constant 0 : i32
    %c0_i32_2 = arith.constant 0 : i32
    %c0_i32_3 = arith.constant 0 : i32
    return %c0_i32, %c0_i32_0, %c0_i32_1, %c0_i32_2 : i32, i32, i32, i32
  }
  func.func @transform_2(%arg0: i32, %arg1: i32) -> (i32, i32) {
    %c0_i32 = arith.constant 0 : i32
    %c0_i32_0 = arith.constant 0 : i32
    %c0_i32_1 = arith.constant 0 : i32
    return %c0_i32, %c0_i32_0 : i32, i32
  }
  func.func @transform_3(%arg0: i32, %arg1: i32) -> (i32, i32, i32) {
    %c2_i32 = arith.constant 2 : i32
    %0 = arith.muli %arg0, %c2_i32 : i32
    %1 = arith.addi %0, %arg1 : i32
    %c0_i32 = arith.constant 0 : i32
    %c0_i32_0 = arith.constant 0 : i32
    %c0_i32_1 = arith.constant 0 : i32
    return %1, %c0_i32, %c0_i32_0 : i32, i32, i32
  }
  func.func @transform_4(%arg0: i32, %arg1: i32) -> (i32, i32, i32) {
    %c2_i32 = arith.constant 2 : i32
    %0 = arith.muli %arg0, %c2_i32 : i32
    %1 = arith.addi %0, %arg1 : i32
    %c0_i32 = arith.constant 0 : i32
    %c0_i32_0 = arith.constant 0 : i32
    %c0_i32_1 = arith.constant 0 : i32
    return %1, %c0_i32, %c0_i32_0 : i32, i32, i32
  }
}

module attributes {stable_mosaic.version = 11 : i64} {
  func.func @_bn_res_relu_kernel(%arg0: i32, %arg1: memref<8x128xf32, #tpu.memory_space<vmem>>, %arg2: memref<1x128xf32, #tpu.memory_space<vmem>>, %arg3: memref<1x128xf32, #tpu.memory_space<vmem>>, %arg4: memref<8x128xf32, #tpu.memory_space<vmem>>, %arg5: memref<8x128xf32, #tpu.memory_space<vmem>>) attributes {dimension_semantics = [#tpu.dimension_semantics<parallel>], iteration_bounds = array<i64: 4>, scalar_prefetch = 0 : i64, scratch_operands = 0 : i64, tpu.core_type = #tpu.core_type<tc>, window_params = [{transform_indices = @transform_0, window_bounds = array<i64: 8, 128>}, {pipeline_mode = #tpu.pipeline_mode<synchronous>, transform_indices = @transform_1, window_bounds = array<i64: 1, 128>}, {pipeline_mode = #tpu.pipeline_mode<synchronous>, transform_indices = @transform_2, window_bounds = array<i64: 1, 128>}, {transform_indices = @transform_3, window_bounds = array<i64: 8, 128>}, {transform_indices = @transform_4, window_bounds = array<i64: 8, 128>}]} {
    %c0 = arith.constant 0 : index
    %c0_0 = arith.constant 0 : index
    %0 = vector.load %arg1[%c0, %c0_0] : memref<8x128xf32, #tpu.memory_space<vmem>>, vector<8x128xf32>
    %c0_1 = arith.constant 0 : index
    %c0_2 = arith.constant 0 : index
    %1 = vector.load %arg2[%c0_1, %c0_2] : memref<1x128xf32, #tpu.memory_space<vmem>>, vector<1x128xf32>
    %2 = vector.broadcast %1 : vector<1x128xf32> to vector<8x128xf32>
    %3 = arith.mulf %0, %2 : vector<8x128xf32>
    %c0_3 = arith.constant 0 : index
    %c0_4 = arith.constant 0 : index
    %4 = vector.load %arg3[%c0_3, %c0_4] : memref<1x128xf32, #tpu.memory_space<vmem>>, vector<1x128xf32>
    %5 = vector.broadcast %4 : vector<1x128xf32> to vector<8x128xf32>
    %6 = arith.addf %3, %5 : vector<8x128xf32>
    %c0_5 = arith.constant 0 : index
    %c0_6 = arith.constant 0 : index
    %7 = vector.load %arg4[%c0_5, %c0_6] : memref<8x128xf32, #tpu.memory_space<vmem>>, vector<8x128xf32>
    %8 = arith.addf %6, %7 : vector<8x128xf32>
    %cst = arith.constant 0.000000e+00 : f32
    %9 = vector.broadcast %cst : f32 to vector<8x128xf32>
    %10 = arith.maximumf %8, %9 : vector<8x128xf32>
    %c0_7 = arith.constant 0 : index
    %c0_8 = arith.constant 0 : index
    %11 = vector.load %arg5[%c0_7, %c0_8] : memref<8x128xf32, #tpu.memory_space<vmem>>, vector<8x128xf32>
    tpu.vector_store %arg5[%c0_7, %c0_8], %10 {strides = array<i32>} : memref<8x128xf32, #tpu.memory_space<vmem>>, vector<8x128xf32>,
    return
  }
  func.func @transform_0(%arg0: i32) -> (i32, i32) {
    %c0_i32 = arith.constant 0 : i32
    %c0_i32_0 = arith.constant 0 : i32
    return %arg0, %c0_i32 : i32, i32
  }
  func.func @transform_1(%arg0: i32) -> (i32, i32) {
    %c0_i32 = arith.constant 0 : i32
    %c0_i32_0 = arith.constant 0 : i32
    %c0_i32_1 = arith.constant 0 : i32
    return %c0_i32, %c0_i32_0 : i32, i32
  }
  func.func @transform_2(%arg0: i32) -> (i32, i32) {
    %c0_i32 = arith.constant 0 : i32
    %c0_i32_0 = arith.constant 0 : i32
    %c0_i32_1 = arith.constant 0 : i32
    return %c0_i32, %c0_i32_0 : i32, i32
  }
  func.func @transform_3(%arg0: i32) -> (i32, i32) {
    %c0_i32 = arith.constant 0 : i32
    %c0_i32_0 = arith.constant 0 : i32
    return %arg0, %c0_i32 : i32, i32
  }
  func.func @transform_4(%arg0: i32) -> (i32, i32) {
    %c0_i32 = arith.constant 0 : i32
    %c0_i32_0 = arith.constant 0 : i32
    return %arg0, %c0_i32 : i32, i32
  }
}

</mosaic_0001>

<llo_original>
// kernel: tile.18
$region0: #{tile.18}
  #allocation0 [shape = 's32[1]{0}', space=sflag, size = 0x4, scoped, tag = 'scoped memory for tile.18']
  %s0 = inlined_call_operand.vmem [shape: f32[8], index: 0, kind: input, shape index: {}]
  %s1 = inlined_call_operand.vmem [shape: f32[16,8], index: 1, kind: output, shape index: {}]
  // Predicated region
  $region2: #{tile.18} parent=0 // pred_check
    _
  $region3: #{tile.18} parent=0 // pred_check_branch
    %3 = sbr.rel (0) target = $region5
  $region4: #{tile.18} parent=0 // pred_region
    _
  $region5: #{tile.18} parent=0 // pred_fallthru
    _
  %v4 = vld [vmem:[%s0] ss:$0 sm:$0xff]
  %5 = vst [vmem:[%s1] sm:$0xff] %v4
  %s6 = scalar_lea.vmem %s1, 8
  %7 = vst [vmem:[%s6] sm:$0xff] %v4

// kernel: tile.19
$region0: #{tile.19}
  %s0 = inlined_call_operand.vmem [shape: f32[16,8], index: 0, kind: input, shape index: {}]
  %s1 = inlined_call_operand.vmem [shape: f32[1,128], index: 1, kind: output, shape index: {}]
  $region1: #{tile.19} parent=0
    #allocation0 [shape = 'u8[4096]{0}', space=vmem, size = 0x1000, scoped, tag = 'scoped mem for output reshape']
    %v2 = vld [vmem:[%s0] sm:$0x1]
    %vm3 = vcmask 64512
    %4 = vst.msk [vmem:[#allocation0] sm:$0x1] %vm3, %v2
    %s5 = scalar_lea.vmem %s0, 15
    %v6 = vld [vmem:[%s5] sm:$0x1]
    %7 = vrot.lane.b32.xlu0 %v6, 120
    %v8 = vpop.permute.xlu0 %7
    %vm9 = vcmask 1048512
    %10 = vst.msk [vmem:[#allocation0] sm:$0x1] %vm9, %v8
    %s11 = scalar_lea.vmem %s0, 14
    %v12 = vld [vmem:[%s11] sm:$0x1]
    %13 = vrot.lane.b32.xlu0 %v12, 112
    %v14 = vpop.permute.xlu0 %13
    %vm15 = vcmask 982912
    %16 = vst.msk [vmem:[#allocation0] sm:$0x1] %vm15, %v14
    %s17 = scalar_lea.vmem %s0, 13
    %v18 = vld [vmem:[%s17] sm:$0x1]
    %19 = vrot.lane.b32.xlu0 %v18, 104
    %v20 = vpop.permute.xlu0 %19
    %vm21 = vcmask 917312
    %22 = vst.msk [vmem:[#allocation0] sm:$0x1] %vm21, %v20
    %s23 = scalar_lea.vmem %s0, 12
    %v24 = vld [vmem:[%s23] sm:$0x1]
    %25 = vrot.lane.b32.xlu0 %v24, 96
    %v26 = vpop.permute.xlu0 %25
    %vm27 = vcmask 851712
    %28 = vst.msk [vmem:[#allocation0] sm:$0x1] %vm27, %v26
    %s29 = scalar_lea.vmem %s0, 11
    %v30 = vld [vmem:[%s29] sm:$0x1]
    %31 = vrot.lane.b32.xlu0 %v30, 88
    %v32 = vpop.permute.xlu0 %31
    %vm33 = vcmask 786112
    %34 = vst.msk [vmem:[#allocation0] sm:$0x1] %vm33, %v32
    %s35 = scalar_lea.vmem %s0, 10
    %v36 = vld [vmem:[%s35] sm:$0x1]
    %37 = vrot.lane.b32.xlu0 %v36, 80
    %v38 = vpop.permute.xlu0 %37
    %vm39 = vcmask 720512
    %40 = vst.msk [vmem:[#allocation0] sm:$0x1] %vm39, %v38
    %s41 = scalar_lea.vmem %s0, 9
    %v42 = vld [vmem:[%s41] sm:$0x1]
    %43 = vrot.lane.b32.xlu0 %v42, 72
    %v44 = vpop.permute.xlu0 %43
    %vm45 = vcmask 654912
    %46 = vst.msk [vmem:[#allocation0] sm:$0x1] %vm45, %v44
    %s47 = scalar_lea.vmem %s0, 8
    %v48 = vld [vmem:[%s47] sm:$0x1]
    %49 = vrot.lane.b32.xlu0 %v48, 64
    %v50 = vpop.permute.xlu0 %49
    %vm51 = vcmask 589312
    %52 = vst.msk [vmem:[#allocation0] sm:$0x1] %vm51, %v50
    %s53 = scalar_lea.vmem %s0, 7
    %v54 = vld [vmem:[%s53] sm:$0x1]
    %55 = vrot.lane.b32.xlu0 %v54, 56
    %v56 = vpop.permute.xlu0 %55
    %vm57 = vcmask 523712
    %58 = vst.msk [vmem:[#allocation0] sm:$0x1] %vm57, %v56
    %s59 = scalar_lea.vmem %s0, 6
    %v60 = vld [vmem:[%s59] sm:$0x1]
    %61 = vrot.lane.b32.xlu0 %v60, 48
    %v62 = vpop.permute.xlu0 %61
    %vm63 = vcmask 458112
    %64 = vst.msk [vmem:[#allocation0] sm:$0x1] %vm63, %v62
    %s65 = scalar_lea.vmem %s0, 5
    %v66 = vld [vmem:[%s65] sm:$0x1]
    %67 = vrot.lane.b32.xlu0 %v66, 40
    %v68 = vpop.permute.xlu0 %67
    %vm69 = vcmask 392512
    %70 = vst.msk [vmem:[#allocation0] sm:$0x1] %vm69, %v68
    %s71 = scalar_lea.vmem %s0, 4
    %v72 = vld [vmem:[%s71] sm:$0x1]
    %73 = vrot.lane.b32.xlu0 %v72, 32
    %v74 = vpop.permute.xlu0 %73
    %vm75 = vcmask 326912
    %76 = vst.msk [vmem:[#allocation0] sm:$0x1] %vm75, %v74
    %s77 = scalar_lea.vmem %s0, 3
    %v78 = vld [vmem:[%s77] sm:$0x1]
    %79 = vrot.lane.b32.xlu0 %v78, 24
    %v80 = vpop.permute.xlu0 %79
    %vm81 = vcmask 261312
    %82 = vst.msk [vmem:[#allocation0] sm:$0x1] %vm81, %v80
    %s83 = scalar_lea.vmem %s0, 2
    %v84 = vld [vmem:[%s83] sm:$0x1]
    %85 = vrot.lane.b32.xlu0 %v84, 16
    %v86 = vpop.permute.xlu0 %85
    %vm87 = vcmask 195712
    %88 = vst.msk [vmem:[#allocation0] sm:$0x1] %vm87, %v86
    %s89 = scalar_lea.vmem %s0, 1
    %v90 = vld [vmem:[%s89] sm:$0x1]
    %91 = vrot.lane.b32.xlu0 %v90, 8
    %v92 = vpop.permute.xlu0 %91
    %vm93 = vcmask 130112
    %94 = vst.msk [vmem:[#allocation0] sm:$0x1] %vm93, %v92
    %s96 = sshllo.u32 0, 1
    %v98 = vld [vmem:[#allocation0] sm:%s96]
    %s99 = sshllo.u32 0, 1
    %100 = vst [vmem:[%s1] sm:%s99] %v98

// kernel: cnn_unit_forward.3
$region0: #{cnn_unit_forward.3}
  #allocation0 [shape = 'u32[]', space=smem, size = 0x4, offset = 0x4, fixed_abs, tag = 'smem constant byte address 0x4 - core index']
  #allocation1 [shape = 'u32[144,128]{1,0:T(1,128)}', space=vmem, size = 0x12000, scoped, tag = 'internal scratch']
  %s0 = inlined_call_operand.vmem [shape: f32[32,128], index: 0, kind: input, shape index: {}]
  %s1 = inlined_call_operand.vmem [shape: f32[1,128], index: 1, kind: input, shape index: {}]
  %s2 = inlined_call_operand.vmem [shape: f32[1,128], index: 2, kind: input, shape index: {}]
  %s3 = inlined_call_operand.vmem [shape: f32[32,128], index: 3, kind: input, shape index: {}]
  %s4 = inlined_call_operand.vmem [shape: f32[32,128], index: 4, kind: output, shape index: {}]
  %s5 = sld [smem:[#allocation0]]
  $region49: #{cnn_unit_forward.3} parent=0
    _
  %s7 = ssub.s32 1, %s5
  %s8 = scalar_select 0, %s7, %s5
  loop: start=0, step=1, limit=6
  $region2: #{cnn_unit_forward.3} parent=0 // loop_pre_header
    _
  $region3: #{cnn_unit_forward.3} parent=0 // loop_header
    %s10 = sphi 0, %s14
    %p11 = scmp.ge.s32.totalorder %s10, 6
    %s20 = sphi 0, %s22
    %s23 = sphi 0, %s20
    %s24 = sphi 0, %s23
    %s40 = sphi 0, %s24
    %s44 = sphi 0, %s44
    %s46 = sphi 0, %s44
    %s47 = sphi 0, %s46
    %s61 = sphi 0, %s47
    %s65 = sphi 0, %s65
    %s67 = sphi 0, %s65
    %s68 = sphi 0, %s67
    %s82 = sphi 0, %s68
    %s88 = sphi 0, %s90
    %s91 = sphi 0, %s88
    %s92 = sphi 0, %s91
    %s108 = sphi 0, %s92
    %s114 = sphi 0, %s116
    %s117 = sphi 0, %s114
    %s118 = sphi 0, %s117
    %s134 = sphi 0, %s118
  $region4: #{cnn_unit_forward.3} parent=0 // loop_header_branch
    %13 = sbr.rel (%p11) target = $region8
  $region5: #{cnn_unit_forward.3} parent=0 // loop_body
    %s15 = ssub.s32 %s10, 1
    %s16 = ssub.s32 %s10, 2
    %s17 = sadd.s32 %s10, 1
    %s18 = ssub.s32 %s10, %s17
    %p19 = scmp.eq.s32.totalorder %s18, 0
    %s21 = sadd.s32 %s20, 1
    %s22 = scalar_select %p19, %s20, %s21
    %p25 = pneg %p19
    %p26 = scmp.eq.s32.totalorder %s10, 3
    %p27 = por %p25, %p26
    %p28 = scmp.ne.s32.totalorder %s20, %s23
    %p29 = scmp.eq.s32.totalorder %s10, 0
    %p30 = por %p28, %p29
    %p31 = scmp.ne.s32.totalorder %s20, %s23
    %p32 = scmp.eq.s32.totalorder %s15, 3
    %p33 = por %p31, %p32
    %p34 = scmp.ne.s32.totalorder %s23, %s24
    %p35 = scmp.eq.s32.totalorder %s15, 0
    %p36 = por %p34, %p35
    %p37 = scmp.ne.s32.totalorder %s23, %s24
    %p38 = scmp.eq.s32.totalorder %s16, 3
    %p39 = por %p37, %p38
    %p41 = scmp.ne.s32.totalorder %s24, %s40
    %p42 = scmp.eq.s32.totalorder %s16, 0
    %p43 = por %p41, %p42
    %s45 = sadd.s32 %s44, 1
    %p48 = scmp.eq.s32.totalorder %s10, 3
    %p49 = scmp.ne.s32.totalorder %s44, %s46
    %p50 = scmp.eq.s32.totalorder %s10, 0
    %p51 = por %p49, %p50
    %p52 = scmp.ne.s32.totalorder %s44, %s46
    %p53 = scmp.eq.s32.totalorder %s15, 3
    %p54 = por %p52, %p53
    %p55 = scmp.ne.s32.totalorder %s46, %s47
    %p56 = scmp.eq.s32.totalorder %s15, 0
    %p57 = por %p55, %p56
    %p58 = scmp.ne.s32.totalorder %s46, %s47
    %p59 = scmp.eq.s32.totalorder %s16, 3
    %p60 = por %p58, %p59
    %p62 = scmp.ne.s32.totalorder %s47, %s61
    %p63 = scmp.eq.s32.totalorder %s16, 0
    %p64 = por %p62, %p63
    %s66 = sadd.s32 %s65, 1
    %p69 = scmp.eq.s32.totalorder %s10, 3
    %p70 = scmp.ne.s32.totalorder %s65, %s67
    %p71 = scmp.eq.s32.totalorder %s10, 0
    %p72 = por %p70, %p71
    %p73 = scmp.ne.s32.totalorder %s65, %s67
    %p74 = scmp.eq.s32.totalorder %s15, 3
    %p75 = por %p73, %p74
    %p76 = scmp.ne.s32.totalorder %s67, %s68
    %p77 = scmp.eq.s32.totalorder %s15, 0
    %p78 = por %p76, %p77
    %p79 = scmp.ne.s32.totalorder %s67, %s68
    %p80 = scmp.eq.s32.totalorder %s16, 3
    %p81 = por %p79, %p80
    %p83 = scmp.ne.s32.totalorder %s68, %s82
    %p84 = scmp.eq.s32.totalorder %s16, 0
    %p85 = por %p83, %p84
    %s86 = ssub.s32 %s10, %s17
    %p87 = scmp.eq.s32.totalorder %s86, 0
    %s89 = sadd.s32 %s88, 1
    %s90 = scalar_select %p87, %s88, %s89
    %p93 = pneg %p87
    %p94 = scmp.eq.s32.totalorder %s10, 3
    %p95 = por %p93, %p94
    %p96 = scmp.ne.s32.totalorder %s88, %s91
    %p97 = scmp.eq.s32.totalorder %s10, 0
    %p98 = por %p96, %p97
    %p99 = scmp.ne.s32.totalorder %s88, %s91
    %p100 = scmp.eq.s32.totalorder %s15, 3
    %p101 = por %p99, %p100
    %p102 = scmp.ne.s32.totalorder %s91, %s92
    %p103 = scmp.eq.s32.totalorder %s15, 0
    %p104 = por %p102, %p103
    %p105 = scmp.ne.s32.totalorder %s91, %s92
    %p106 = scmp.eq.s32.totalorder %s16, 3
    %p107 = por %p105, %p106
    %p109 = scmp.ne.s32.totalorder %s92, %s108
    %p110 = scmp.eq.s32.totalorder %s16, 0
    %p111 = por %p109, %p110
    %s112 = ssub.s32 %s10, %s17
    %p113 = scmp.eq.s32.totalorder %s112, 0
    %s115 = sadd.s32 %s114, 1
    %s116 = scalar_select %p113, %s114, %s115
    %p119 = pneg %p113
    %p120 = scmp.eq.s32.totalorder %s10, 3
    %p121 = por %p119, %p120
    %p122 = scmp.ne.s32.totalorder %s114, %s117
    %p123 = scmp.eq.s32.totalorder %s10, 0
    %p124 = por %p122, %p123
    %p125 = scmp.ne.s32.totalorder %s114, %s117
    %p126 = scmp.eq.s32.totalorder %s15, 3
    %p127 = por %p125, %p126
    %p128 = scmp.ne.s32.totalorder %s117, %s118
    %p129 = scmp.eq.s32.totalorder %s15, 0
    %p130 = por %p128, %p129
    %p131 = scmp.ne.s32.totalorder %s117, %s118
    %p132 = scmp.eq.s32.totalorder %s16, 3
    %p133 = por %p131, %p132
    %p135 = scmp.ne.s32.totalorder %s118, %s134
    %p136 = scmp.eq.s32.totalorder %s16, 0
    %p137 = por %p135, %p136
    %p138 = scmp.le.s32.totalorder 1, %s10
    %p139 = scmp.lt.s32.totalorder %s10, 5
    %p140 = pnand %p138, %p139
    %p141 = pneg %p140
    // Predicated region
    $region9: #{cnn_unit_forward.3} parent=5 // pred_check
      _
    $region10: #{cnn_unit_forward.3} parent=5 // pred_check_branch
      %143 = sbr.rel (%p140) target = $region12
    $region11: #{cnn_unit_forward.3} parent=5 // pred_region
      %s144 = ssub.s32 %s10, 1
      // Predicated region
      $region13: #{cnn_unit_forward.3} parent=11 // pred_check
        %p145 = pneg %p57
      $region14: #{cnn_unit_forward.3} parent=11 // pred_check_branch
        %147 = sbr.rel (%p145) target = $region16
      $region15: #{cnn_unit_forward.3} parent=11 // pred_region
        _
      $region16: #{cnn_unit_forward.3} parent=11 // pred_fallthru
        _
      // Predicated region
      $region17: #{cnn_unit_forward.3} parent=11 // pred_check
        %p148 = pneg %p78
      $region18: #{cnn_unit_forward.3} parent=11 // pred_check_branch
        %150 = sbr.rel (%p148) target = $region20
      $region19: #{cnn_unit_forward.3} parent=11 // pred_region
        _
      $region20: #{cnn_unit_forward.3} parent=11 // pred_fallthru
        _
    $region12: #{cnn_unit_forward.3} parent=5 // pred_fallthru
      _
    %p151 = scmp.lt.s32.totalorder %s10, 4
    // Predicated region
    $region21: #{cnn_unit_forward.3} parent=5 // pred_check
      %p152 = pneg %p151
    $region22: #{cnn_unit_forward.3} parent=5 // pred_check_branch
      %154 = sbr.rel (%p152) target = $region24
    $region23: #{cnn_unit_forward.3} parent=5 // pred_region
      // Predicated region
      $region25: #{cnn_unit_forward.3} parent=23 // pred_check
        %p155 = pneg %p30
      $region26: #{cnn_unit_forward.3} parent=23 // pred_check_branch
        %157 = sbr.rel (%p155) target = $region28
      $region27: #{cnn_unit_forward.3} parent=23 // pred_region
        %p158 = scmp.lt.s32.totalorder %s10, 3
        %s159 = scalar_select %p158, %s10, 3
        %s160 = smul.addr %s159, 8
        %s161 = scalar_lea.vmem %s0, %s160
      $region28: #{cnn_unit_forward.3} parent=23 // pred_fallthru
        _
      // Predicated region
      $region29: #{cnn_unit_forward.3} parent=23 // pred_check
        %p162 = pneg %p98
      $region30: #{cnn_unit_forward.3} parent=23 // pred_check_branch
        %164 = sbr.rel (%p162) target = $region32
      $region31: #{cnn_unit_forward.3} parent=23 // pred_region
        %p165 = scmp.lt.s32.totalorder %s10, 3
        %s166 = scalar_select %p165, %s10, 3
        %s167 = smul.addr %s166, 8
        %s168 = scalar_lea.vmem %s3, %s167
      $region32: #{cnn_unit_forward.3} parent=23 // pred_fallthru
        _
    $region24: #{cnn_unit_forward.3} parent=5 // pred_fallthru
      _
    %p169 = scmp.le.s32.totalorder 1, %s10
    %p170 = scmp.lt.s32.totalorder %s10, 5
    %p171 = pnand %p169, %p170
    %p172 = pneg %p171
    // Predicated region
    $region33: #{cnn_unit_forward.3} parent=5 // pred_check
      _
    $region34: #{cnn_unit_forward.3} parent=5 // pred_check_branch
      %174 = sbr.rel (%p171) target = $region36
    $region35: #{cnn_unit_forward.3} parent=5 // pred_region
      %s175 = ssub.s32 %s10, 1
      %p176 = scmp.lt.s32.totalorder %s15, 3
      %s177 = scalar_select %p176, %s15, 3
      %s178 = smul.addr %s177, 8
      %s179 = scalar_lea.vmem %s0, %s178
      %p180 = pneg %p36
      %p181 = pneg %p33
      %p182 = pneg %p57
      %p183 = pneg %p54
      %p184 = pneg %p78
      %p185 = pneg %p75
      %p186 = scmp.lt.s32.totalorder %s15, 3
      %s187 = scalar_select %p186, %s15, 3
      %s188 = smul.addr %s187, 8
      %s189 = scalar_lea.vmem %s3, %s188
      %p190 = pneg %p104
      %p191 = pneg %p101
      %p192 = pneg %p130
      %p193 = pneg %p127
      %p194 = scmp.lt.s32.totalorder %s15, 3
      %s195 = scalar_select %p194, %s15, 3
      %s196 = smul.addr %s195, 8
      %s197 = scalar_lea.vmem %s4, %s196
      %p198 = scmp.lt.s32.totalorder %s15, 3
      %s199 = scalar_select %p198, %s15, 3
      %s200 = smul.addr %s199, 8
      %s201 = scalar_lea.vmem %s0, %s200
      %p202 = scmp.lt.s32.totalorder %s15, 3
      %s203 = scalar_select %p202, %s15, 3
      %s204 = smul.addr %s203, 8
      %s205 = scalar_lea.vmem %s3, %s204
      %p206 = scmp.lt.s32.totalorder %s15, 3
      %s207 = scalar_select %p206, %s15, 3
      %s208 = smul.addr %s207, 8
      %s209 = scalar_lea.vmem %s4, %s208
      %v210 = vld [vmem:[%s201] sm:$0xff]
      %v211 = vld [vmem:[%s1] sm:$0x1]
      %v213 = vlaneseq
      %v214 = vshrl.u32 %v213, 7
      %v215 = vsub.s32 0, %v214
      %v216 = vrot.slane %v211, %v215
      %v218 = vmul.f32 %v210, %v216
      %v219 = vld [vmem:[%s2] sm:$0x1]
      %v221 = vlaneseq
      %v222 = vshrl.u32 %v221, 7
      %v223 = vsub.s32 0, %v222
      %v224 = vrot.slane %v219, %v223
      %v226 = vadd.f32 %v218, %v224
      %v227 = vld [vmem:[%s205] sm:$0xff]
      %v228 = vadd.f32 %v226, %v227
      %v229 = vmax.f32 %v228, 0.0
      %230 = vst [vmem:[%s209] sm:$0xff] %v229
      %p231 = scmp.lt.s32.totalorder %s15, 3
      %s232 = scalar_select %p231, %s15, 3
      %s233 = smul.addr %s232, 8
      %s234 = scalar_lea.vmem %s4, %s233
      // Predicated region
      $region37: #{cnn_unit_forward.3} parent=35 // pred_check
        %p235 = pneg %p127
      $region38: #{cnn_unit_forward.3} parent=35 // pred_check_branch
        %237 = sbr.rel (%p235) target = $region40
      $region39: #{cnn_unit_forward.3} parent=35 // pred_region
        _
      $region40: #{cnn_unit_forward.3} parent=35 // pred_fallthru
        _
    $region36: #{cnn_unit_forward.3} parent=5 // pred_fallthru
      _
    %p238 = scmp.le.s32.totalorder 2, %s10
    // Predicated region
    $region41: #{cnn_unit_forward.3} parent=5 // pred_check
      %p239 = pneg %p238
    $region42: #{cnn_unit_forward.3} parent=5 // pred_check_branch
      %241 = sbr.rel (%p239) target = $region44
    $region43: #{cnn_unit_forward.3} parent=5 // pred_region
      %s242 = ssub.s32 %s10, 2
      // Predicated region
      $region45: #{cnn_unit_forward.3} parent=43 // pred_check
        %p243 = pneg %p133
      $region46: #{cnn_unit_forward.3} parent=43 // pred_check_branch
        %245 = sbr.rel (%p243) target = $region48
      $region47: #{cnn_unit_forward.3} parent=43 // pred_region
        %p246 = scmp.lt.s32.totalorder %s16, 3
        %s247 = scalar_select %p246, %s16, 3
        %s248 = smul.addr %s247, 8
        %s249 = scalar_lea.vmem %s4, %s248
      $region48: #{cnn_unit_forward.3} parent=43 // pred_fallthru
        _
    $region44: #{cnn_unit_forward.3} parent=5 // pred_fallthru
      _
  $region6: #{cnn_unit_forward.3} parent=0 // loop_footer
    %s14 = sadd.s32 1, %s10
  $region7: #{cnn_unit_forward.3} parent=0 // loop_footer_branch
    %9 = sbr.rel target = $region3
  $region8: #{cnn_unit_forward.3} parent=0 // loop_exit
    _

// kernel: cnn_unit_forward.2
$region0: #{cnn_unit_forward.2}
  #allocation0 [shape = 'u32[]', space=smem, size = 0x4, offset = 0x4, fixed_abs, tag = 'smem constant byte address 0x4 - core index']
  #allocation1 [shape = 'u32[144,128]{1,0:T(1,128)}', space=vmem, size = 0x12000, scoped, tag = 'internal scratch']
  %s0 = inlined_call_operand.vmem [shape: bf16[2,18,18,4], index: 0, kind: input, shape index: {}]
  %s1 = inlined_call_operand.vmem [shape: bf16[3,3,4,8], index: 1, kind: input, shape index: {}]
  %s2 = inlined_call_operand.vmem [shape: f32[1,8], index: 2, kind: input, shape index: {}]
  %s3 = inlined_call_operand.vmem [shape: f32[32,16,8], index: 3, kind: output, shape index: {0}]
  %s4 = inlined_call_operand.vmem [shape: f32[4,2,8], index: 4, kind: output, shape index: {1}]
  %5 = xla_tuple %s3, %s4
  %s6 = sld [smem:[#allocation0]]
  $region53: #{cnn_unit_forward.2} parent=0
    _
  %s8 = ssub.s32 1, %s6
  %s9 = scalar_select 0, %s8, %s6
  loop: start=0, step=1, limit=6
  $region2: #{cnn_unit_forward.2} parent=0 // loop_pre_header
    _
  $region3: #{cnn_unit_forward.2} parent=0 // loop_header
    %s11 = sphi 0, %s15
    %p12 = scmp.ge.s32.totalorder %s11, 6
    %s18 = sphi 0, %s30
    %s19 = sphi 0, %s26
    %s20 = sphi 0, %s18
    %s21 = sphi 0, %s19
    %s22 = sphi 0, %s20
    %s23 = sphi 0, %s21
    %s33 = sphi 0, %s35
    %s36 = sphi 0, %s33
    %s37 = sphi 0, %s36
    %s53 = sphi 0, %s37
    %s57 = sphi 0, %s57
    %s59 = sphi 0, %s57
    %s60 = sphi 0, %s59
    %s74 = sphi 0, %s60
    %s78 = sphi 0, %s78
    %s80 = sphi 0, %s78
    %s81 = sphi 0, %s80
    %s95 = sphi 0, %s81
    %s105 = sphi 0, %s107
    %s108 = sphi 0, %s105
    %s109 = sphi 0, %s108
    %s125 = sphi 0, %s109
    %s135 = sphi 0, %s137
    %s138 = sphi 0, %s135
    %s139 = sphi 0, %s138
    %s155 = sphi 0, %s139
  $region4: #{cnn_unit_forward.2} parent=0 // loop_header_branch
    %14 = sbr.rel (%p12) target = $region8
  $region5: #{cnn_unit_forward.2} parent=0 // loop_body
    %s16 = ssub.s32 %s11, 1
    %s17 = ssub.s32 %s11, 2
    %s24 = sadd.s32 1, %s19
    %p25 = scmp.ge.s32.totalorder %s24, 2
    %s26 = scalar_select %p25, 0, %s24
    %s27 = sadd.s32 1, %s18
    %s28 = scalar_select %p25, %s27, %s18
    %p29 = scmp.ge.s32.totalorder %s28, 2
    %s30 = scalar_select %p29, 0, %s28
    %s31 = ssub.s32 %s18, %s30
    %p32 = scmp.eq.s32.totalorder %s31, 0
    %s34 = sadd.s32 %s33, 1
    %s35 = scalar_select %p32, %s33, %s34
    %p38 = pneg %p32
    %p39 = scmp.eq.s32.totalorder %s11, 3
    %p40 = por %p38, %p39
    %p41 = scmp.ne.s32.totalorder %s33, %s36
    %p42 = scmp.eq.s32.totalorder %s11, 0
    %p43 = por %p41, %p42
    %p44 = scmp.ne.s32.totalorder %s33, %s36
    %p45 = scmp.eq.s32.totalorder %s16, 3
    %p46 = por %p44, %p45
    %p47 = scmp.ne.s32.totalorder %s36, %s37
    %p48 = scmp.eq.s32.totalorder %s16, 0
    %p49 = por %p47, %p48
    %p50 = scmp.ne.s32.totalorder %s36, %s37
    %p51 = scmp.eq.s32.totalorder %s17, 3
    %p52 = por %p50, %p51
    %p54 = scmp.ne.s32.totalorder %s37, %s53
    %p55 = scmp.eq.s32.totalorder %s17, 0
    %p56 = por %p54, %p55
    %s58 = sadd.s32 %s57, 1
    %p61 = scmp.eq.s32.totalorder %s11, 3
    %p62 = scmp.ne.s32.totalorder %s57, %s59
    %p63 = scmp.eq.s32.totalorder %s11, 0
    %p64 = por %p62, %p63
    %p65 = scmp.ne.s32.totalorder %s57, %s59
    %p66 = scmp.eq.s32.totalorder %s16, 3
    %p67 = por %p65, %p66
    %p68 = scmp.ne.s32.totalorder %s59, %s60
    %p69 = scmp.eq.s32.totalorder %s16, 0
    %p70 = por %p68, %p69
    %p71 = scmp.ne.s32.totalorder %s59, %s60
    %p72 = scmp.eq.s32.totalorder %s17, 3
    %p73 = por %p71, %p72
    %p75 = scmp.ne.s32.totalorder %s60, %s74
    %p76 = scmp.eq.s32.totalorder %s17, 0
    %p77 = por %p75, %p76
    %s79 = sadd.s32 %s78, 1
    %p82 = scmp.eq.s32.totalorder %s11, 3
    %p83 = scmp.ne.s32.totalorder %s78, %s80
    %p84 = scmp.eq.s32.totalorder %s11, 0
    %p85 = por %p83, %p84
    %p86 = scmp.ne.s32.totalorder %s78, %s80
    %p87 = scmp.eq.s32.totalorder %s16, 3
    %p88 = por %p86, %p87
    %p89 = scmp.ne.s32.totalorder %s80, %s81
    %p90 = scmp.eq.s32.totalorder %s16, 0
    %p91 = por %p89, %p90
    %p92 = scmp.ne.s32.totalorder %s80, %s81
    %p93 = scmp.eq.s32.totalorder %s17, 3
    %p94 = por %p92, %p93
    %p96 = scmp.ne.s32.totalorder %s81, %s95
    %p97 = scmp.eq.s32.totalorder %s17, 0
    %p98 = por %p96, %p97
    %s99 = smul.u32 %s18, 2
    %s100 = sadd.s32 %s99, %s19
    %s101 = smul.u32 %s30, 2
    %s102 = sadd.s32 %s101, %s26
    %s103 = ssub.s32 %s100, %s102
    %p104 = scmp.eq.s32.totalorder %s103, 0
    %s106 = sadd.s32 %s105, 1
    %s107 = scalar_select %p104, %s105, %s106
    %p110 = pneg %p104
    %p111 = scmp.eq.s32.totalorder %s11, 3
    %p112 = por %p110, %p111
    %p113 = scmp.ne.s32.totalorder %s105, %s108
    %p114 = scmp.eq.s32.totalorder %s11, 0
    %p115 = por %p113, %p114
    %p116 = scmp.ne.s32.totalorder %s105, %s108
    %p117 = scmp.eq.s32.totalorder %s16, 3
    %p118 = por %p116, %p117
    %p119 = scmp.ne.s32.totalorder %s108, %s109
    %p120 = scmp.eq.s32.totalorder %s16, 0
    %p121 = por %p119, %p120
    %p122 = scmp.ne.s32.totalorder %s108, %s109
    %p123 = scmp.eq.s32.totalorder %s17, 3
    %p124 = por %p122, %p123
    %p126 = scmp.ne.s32.totalorder %s109, %s125
    %p127 = scmp.eq.s32.totalorder %s17, 0
    %p128 = por %p126, %p127
    %s129 = smul.u32 %s18, 2
    %s130 = sadd.s32 %s129, %s19
    %s131 = smul.u32 %s30, 2
    %s132 = sadd.s32 %s131, %s26
    %s133 = ssub.s32 %s130, %s132
    %p134 = scmp.eq.s32.totalorder %s133, 0
    %s136 = sadd.s32 %s135, 1
    %s137 = scalar_select %p134, %s135, %s136
    %p140 = pneg %p134
    %p141 = scmp.eq.s32.totalorder %s11, 3
    %p142 = por %p140, %p141
    %p143 = scmp.ne.s32.totalorder %s135, %s138
    %p144 = scmp.eq.s32.totalorder %s11, 0
    %p145 = por %p143, %p144
    %p146 = scmp.ne.s32.totalorder %s135, %s138
    %p147 = scmp.eq.s32.totalorder %s16, 3
    %p148 = por %p146, %p147
    %p149 = scmp.ne.s32.totalorder %s138, %s139
    %p150 = scmp.eq.s32.totalorder %s16, 0
    %p151 = por %p149, %p150
    %p152 = scmp.ne.s32.totalorder %s138, %s139
    %p153 = scmp.eq.s32.totalorder %s17, 3
    %p154 = por %p152, %p153
    %p156 = scmp.ne.s32.totalorder %s139, %s155
    %p157 = scmp.eq.s32.totalorder %s17, 0
    %p158 = por %p156, %p157
    %p159 = scmp.le.s32.totalorder 1, %s11
    %p160 = scmp.lt.s32.totalorder %s11, 5
    %p161 = pnand %p159, %p160
    %p162 = pneg %p161
    // Predicated region
    $region9: #{cnn_unit_forward.2} parent=5 // pred_check
      _
    $region10: #{cnn_unit_forward.2} parent=5 // pred_check_branch
      %164 = sbr.rel (%p161) target = $region12
    $region11: #{cnn_unit_forward.2} parent=5 // pred_region
      %s165 = ssub.s32 %s11, 1
      // Predicated region
      $region13: #{cnn_unit_forward.2} parent=11 // pred_check
        %p166 = pneg %p70
      $region14: #{cnn_unit_forward.2} parent=11 // pred_check_branch
        %168 = sbr.rel (%p166) target = $region16
      $region15: #{cnn_unit_forward.2} parent=11 // pred_region
        _
      $region16: #{cnn_unit_forward.2} parent=11 // pred_fallthru
        _
      // Predicated region
      $region17: #{cnn_unit_forward.2} parent=11 // pred_check
        %p169 = pneg %p91
      $region18: #{cnn_unit_forward.2} parent=11 // pred_check_branch
        %171 = sbr.rel (%p169) target = $region20
      $region19: #{cnn_unit_forward.2} parent=11 // pred_region
        _
      $region20: #{cnn_unit_forward.2} parent=11 // pred_fallthru
        _
    $region12: #{cnn_unit_forward.2} parent=5 // pred_fallthru
      _
    %p172 = scmp.lt.s32.totalorder %s11, 4
    // Predicated region
    $region21: #{cnn_unit_forward.2} parent=5 // pred_check
      %p173 = pneg %p172
    $region22: #{cnn_unit_forward.2} parent=5 // pred_check_branch
      %175 = sbr.rel (%p173) target = $region24
    $region23: #{cnn_unit_forward.2} parent=5 // pred_region
      // Predicated region
      $region25: #{cnn_unit_forward.2} parent=23 // pred_check
        %p176 = pneg %p43
      $region26: #{cnn_unit_forward.2} parent=23 // pred_check_branch
        %178 = sbr.rel (%p176) target = $region28
      $region27: #{cnn_unit_forward.2} parent=23 // pred_region
        %p179 = scmp.lt.s32.totalorder %s18, 1
        %s180 = scalar_select %p179, %s18, 1
        %s181 = smul.addr %s180, 54
        %s182 = smul.addr %s181, 4
        %s183 = scalar_lea.vmem %s0, %s182
      $region28: #{cnn_unit_forward.2} parent=23 // pred_fallthru
        _
    $region24: #{cnn_unit_forward.2} parent=5 // pred_fallthru
      _
    %p184 = scmp.le.s32.totalorder 1, %s11
    %p185 = scmp.lt.s32.totalorder %s11, 5
    %p186 = pnand %p184, %p185
    %p187 = pneg %p186
    // Predicated region
    $region29: #{cnn_unit_forward.2} parent=5 // pred_check
      _
    $region30: #{cnn_unit_forward.2} parent=5 // pred_check_branch
      %189 = sbr.rel (%p186) target = $region32
    $region31: #{cnn_unit_forward.2} parent=5 // pred_region
      %s190 = ssub.s32 %s11, 1
      %p191 = scmp.lt.s32.totalorder %s20, 1
      %s192 = scalar_select %p191, %s20, 1
      %s193 = smul.addr %s192, 54
      %s194 = smul.addr %s193, 4
      %s195 = scalar_lea.vmem %s0, %s194
      %p196 = pneg %p49
      %p197 = pneg %p46
      %p198 = pneg %p70
      %p199 = pneg %p67
      %p200 = pneg %p91
      %p201 = pneg %p88
      %p202 = pneg %p121
      %p203 = pneg %p118
      %s204 = smul.u32 %s20, 2
      %s205 = sadd.s32 %s204, %s21
      %s206 = smul.u32 8, %s205
      %p207 = scmp.lt.s32.totalorder %s206, 31
      %s208 = scalar_select %p207, %s206, 31
      %s209 = smul.addr %s208, 2
      %s210 = smul.addr %s209, 8
      %s211 = scalar_lea.vmem %s3, %s210
      %p212 = pneg %p151
      %p213 = pneg %p148
      %s214 = smul.u32 %s20, 2
      %s215 = sadd.s32 %s214, %s21
      %p216 = scmp.lt.s32.totalorder %s215, 3
      %s217 = scalar_select %p216, %s215, 3
      %s218 = smul.addr %s217, 2
      %s219 = scalar_lea.vmem %s4, %s218
      %p220 = scmp.lt.s32.totalorder %s20, 1
      %s221 = scalar_select %p220, %s20, 1
      %s222 = smul.addr %s221, 54
      %s223 = smul.addr %s222, 4
      %s224 = scalar_lea.vmem %s0, %s223
      %s225 = smul.u32 %s20, 2
      %s226 = sadd.s32 %s225, %s21
      %s227 = smul.u32 8, %s226
      %p228 = scmp.lt.s32.totalorder %s227, 31
      %s229 = scalar_select %p228, %s227, 31
      %s230 = smul.addr %s229, 2
      %s231 = smul.addr %s230, 8
      %s232 = scalar_lea.vmem %s3, %s231
      %s233 = smul.u32 %s20, 2
      %s234 = sadd.s32 %s233, %s21
      %s235 = smul.u32 8, %s234
      %s236 = smul.u32 %s20, 2
      %s237 = sadd.s32 %s236, %s21
      %p238 = scmp.lt.s32.totalorder %s237, 3
      %s239 = scalar_select %p238, %s237, 3
      %s240 = smul.addr %s239, 2
      %s241 = scalar_lea.vmem %s4, %s240
      %s242 = smul.u32 %s20, 2
      %s243 = sadd.s32 %s242, %s21
      %s245 = smul.u32 %s21, 8
      %v246 = vld [vmem:[%s1] sm:$0x3]
      %v247 = vld [vmem:[%s1 + $0x2] sm:$0x3]
      %v248 = vld [vmem:[%s1 + $0x4] sm:$0x3]
      %v249 = vld [vmem:[%s1 + $0x6] sm:$0x3]
      %v250 = vld [vmem:[%s1 + $0x8] sm:$0x3]
      %v251 = vld [vmem:[%s1 + $0xa] sm:$0x3]
      %v252 = vld [vmem:[%s1 + $0xc] sm:$0x3]
      %v253 = vld [vmem:[%s1 + $0xe] sm:$0x3]
      %v254 = vld [vmem:[%s1 + $0x10] sm:$0x3]
      %s255 = smul.u32 %s245, 3
      %s256 = smul.addr %s255, 4
      %s257 = scalar_lea.vmem %s224, %s256
      %v258 = vld [vmem:[%s257] sm:$0xf]
      %v259 = vld [vmem:[%s257 + $0x4] sm:$0xf]
      %v260 = vld [vmem:[%s257 + $0x8] sm:$0x1]
      %v261 = vld [vmem:[%s257 + $0xc] sm:$0xf]
      %v262 = vld [vmem:[%s257 + $0x10] sm:$0xf]
      %v263 = vld [vmem:[%s257 + $0x14] sm:$0x1]
      %v264 = vld [vmem:[%s257 + $0x18] sm:$0xf]
      %v265 = vld [vmem:[%s257 + $0x1c] sm:$0xf]
      %v266 = vld [vmem:[%s257 + $0x20] sm:$0x1]
      %v267 = vld [vmem:[%s257 + $0x24] sm:$0xf]
      %v268 = vld [vmem:[%s257 + $0x28] sm:$0xf]
      %v269 = vld [vmem:[%s257 + $0x2c] sm:$0x1]
      %v270 = vld [vmem:[%s257 + $0x30] sm:$0xf]
      %v271 = vld [vmem:[%s257 + $0x34] sm:$0xf]
      %v272 = vld [vmem:[%s257 + $0x38] sm:$0x1]
      %v273 = vld [vmem:[%s257 + $0x3c] sm:$0xf]
      %v274 = vld [vmem:[%s257 + $0x40] sm:$0xf]
      %v275 = vld [vmem:[%s257 + $0x44] sm:$0x1]
      %v276 = vld [vmem:[%s257 + $0x48] sm:$0xf]
      %v277 = vld [vmem:[%s257 + $0x4c] sm:$0xf]
      %v278 = vld [vmem:[%s257 + $0x50] sm:$0x1]
      %v279 = vld [vmem:[%s257 + $0x54] sm:$0xf]
      %v280 = vld [vmem:[%s257 + $0x58] sm:$0xf]
      %v281 = vld [vmem:[%s257 + $0x5c] sm:$0x1]
      %vm282 = vsmask.f32 3328
      %vm283 = vsmask.f32 7440
      %vm284 = vmor %vm282, %vm283
      %v286 = vshrl.u32 %v258, 16
      %v288 = vrot.slane %v286, 4
      %v289 = vshll.u32 %v258, 16
      %v291 = vrot.slane %v289, 5
      %v292 = vor.u32 %v288, %v291
      %v293 = vrot.slane %v292, 4
      %v295 = vshll.u32 %v259, 16
      %v297 = vrot.slane %v295, 5
      %v298 = vsel %vm284, %v293, %v297
      %v299 = vshrl.u32 %v259, 16
      %v301 = vrot.slane %v299, 4
      %v302 = vor.u32 %v301, %v297
      %v303 = vrot.slane %v302, 4
      %v305 = vshll.u32 %v260, 16
      %v307 = vrot.slane %v305, 5
      %v308 = vsel %vm284, %v303, %v307
      %v310 = vshrl.u32 %v261, 16
      %v312 = vrot.slane %v310, 4
      %v313 = vshll.u32 %v261, 16
      %v315 = vrot.slane %v313, 5
      %v316 = vor.u32 %v312, %v315
      %v317 = vrot.slane %v316, 4
      %v319 = vshll.u32 %v262, 16
      %v321 = vrot.slane %v319, 5
      %v322 = vsel %vm284, %v317, %v321
      %v323 = vshrl.u32 %v262, 16
      %v325 = vrot.slane %v323, 4
      %v326 = vor.u32 %v325, %v321
      %v327 = vrot.slane %v326, 4
      %v329 = vshll.u32 %v263, 16
      %v331 = vrot.slane %v329, 5
      %v332 = vsel %vm284, %v327, %v331
      %v334 = vshrl.u32 %v264, 16
      %v336 = vrot.slane %v334, 4
      %v337 = vshll.u32 %v264, 16
      %v339 = vrot.slane %v337, 5
      %v340 = vor.u32 %v336, %v339
      %v341 = vrot.slane %v340, 4
      %v343 = vshll.u32 %v265, 16
      %v345 = vrot.slane %v343, 5
      %v346 = vsel %vm284, %v341, %v345
      %v347 = vshrl.u32 %v265, 16
      %v349 = vrot.slane %v347, 4
      %v350 = vor.u32 %v349, %v345
      %v351 = vrot.slane %v350, 4
      %v353 = vshll.u32 %v266, 16
      %v355 = vrot.slane %v353, 5
      %v356 = vsel %vm284, %v351, %v355
      %v358 = vshrl.u32 %v267, 16
      %v360 = vrot.slane %v358, 4
      %v361 = vshll.u32 %v267, 16
      %v363 = vrot.slane %v361, 5
      %v364 = vor.u32 %v360, %v363
      %v365 = vrot.slane %v364, 4
      %v367 = vshll.u32 %v268, 16
      %v369 = vrot.slane %v367, 5
      %v370 = vsel %vm284, %v365, %v369
      %v371 = vshrl.u32 %v268, 16
      %v373 = vrot.slane %v371, 4
      %v374 = vor.u32 %v373, %v369
      %v375 = vrot.slane %v374, 4
      %v377 = vshll.u32 %v269, 16
      %v379 = vrot.slane %v377, 5
      %v380 = vsel %vm284, %v375, %v379
      %v382 = vshrl.u32 %v270, 16
      %v384 = vrot.slane %v382, 4
      %v385 = vshll.u32 %v270, 16
      %v387 = vrot.slane %v385, 5
      %v388 = vor.u32 %v384, %v387
      %v389 = vrot.slane %v388, 4
      %v391 = vshll.u32 %v271, 16
      %v393 = vrot.slane %v391, 5
      %v394 = vsel %vm284, %v389, %v393
      %v395 = vshrl.u32 %v271, 16
      %v397 = vrot.slane %v395, 4
      %v398 = vor.u32 %v397, %v393
      %v399 = vrot.slane %v398, 4
      %v401 = vshll.u32 %v272, 16
      %v403 = vrot.slane %v401, 5
      %v404 = vsel %vm284, %v399, %v403
      %v406 = vshrl.u32 %v273, 16
      %v408 = vrot.slane %v406, 4
      %v409 = vshll.u32 %v273, 16
      %v411 = vrot.slane %v409, 5
      %v412 = vor.u32 %v408, %v411
      %v413 = vrot.slane %v412, 4
      %v415 = vshll.u32 %v274, 16
      %v417 = vrot.slane %v415, 5
      %v418 = vsel %vm284, %v413, %v417
      %v419 = vshrl.u32 %v274, 16
      %v421 = vrot.slane %v419, 4
      %v422 = vor.u32 %v421, %v417
      %v423 = vrot.slane %v422, 4
      %v425 = vshll.u32 %v275, 16
      %v427 = vrot.slane %v425, 5
      %v428 = vsel %vm284, %v423, %v427
      %v430 = vshrl.u32 %v276, 16
      %v432 = vrot.slane %v430, 4
      %v433 = vshll.u32 %v276, 16
      %v435 = vrot.slane %v433, 5
      %v436 = vor.u32 %v432, %v435
      %v437 = vrot.slane %v436, 4
      %v439 = vshll.u32 %v277, 16
      %v441 = vrot.slane %v439, 5
      %v442 = vsel %vm284, %v437, %v441
      %v443 = vshrl.u32 %v277, 16
      %v445 = vrot.slane %v443, 4
      %v446 = vor.u32 %v445, %v441
      %v447 = vrot.slane %v446, 4
      %v449 = vshll.u32 %v278, 16
      %v451 = vrot.slane %v449, 5
      %v452 = vsel %vm284, %v447, %v451
      %v454 = vshrl.u32 %v279, 16
      %v456 = vrot.slane %v454, 4
      %v457 = vshll.u32 %v279, 16
      %v459 = vrot.slane %v457, 5
      %v460 = vor.u32 %v456, %v459
      %v461 = vrot.slane %v460, 4
      %v463 = vshll.u32 %v280, 16
      %v465 = vrot.slane %v463, 5
      %v466 = vsel %vm284, %v461, %v465
      %v467 = vshrl.u32 %v280, 16
      %v469 = vrot.slane %v467, 4
      %v470 = vor.u32 %v469, %v465
      %v471 = vrot.slane %v470, 4
      %v473 = vshll.u32 %v281, 16
      %v475 = vrot.slane %v473, 5
      %v476 = vsel %vm284, %v471, %v475
      %v477 = vunpack.c.l.b16 %v298
      %v478 = vunpack.c.l.b16 %v308
      %v479 = vunpack.c.l.b16 %v322
      %v480 = vunpack.c.l.b16 %v332
      %v481 = vunpack.c.l.b16 %v346
      %v482 = vunpack.c.l.b16 %v356
      %v483 = vunpack.c.l.b16 %v370
      %v484 = vunpack.c.l.b16 %v380
      %v485 = vunpack.c.l.b16 %v394
      %v486 = vunpack.c.l.b16 %v404
      %v487 = vunpack.c.l.b16 %v418
      %v488 = vunpack.c.l.b16 %v428
      %v489 = vunpack.c.l.b16 %v442
      %v490 = vunpack.c.l.b16 %v452
      %v491 = vunpack.c.l.b16 %v466
      %v492 = vunpack.c.l.b16 %v476
      %v493 = vpack.c.b16 %v478, %v477
      %v494 = vpack.c.b16 %v480, %v479
      %v495 = vpack.c.b16 %v482, %v481
      %v496 = vpack.c.b16 %v484, %v483
      %v497 = vpack.c.b16 %v486, %v485
      %v498 = vpack.c.b16 %v488, %v487
      %v499 = vpack.c.b16 %v490, %v489
      %v500 = vpack.c.b16 %v492, %v491
      %vm501 = vcmask 31744
      %v503 = vsel %vm501, %v493, 0
      %v506 = vsel %vm501, %v494, 0
      %v509 = vsel %vm501, %v495, 0
      %v512 = vsel %vm501, %v496, 0
      %v515 = vsel %vm501, %v497, 0
      %v518 = vsel %vm501, %v498, 0
      %v521 = vsel %vm501, %v499, 0
      %v524 = vsel %vm501, %v500, 0
      %vm526 = vcmask 1041408
      %v528 = vsel %vm526, %v247, 0
      %530 = vmatprep.subr.bf16.mxu0 0
      %531 = vmatpush1.bf16.msra.mxu0 %v528
      %532 = vmatprep.subr.bf16.mxu0 0
      %533 = vmatpush1.bf16.msra.mxu0 0
      %534 = vmatprep.subr.bf16.mxu0 0
      %535 = vmatpush1.bf16.msra.mxu0 0
      %536 = vmatprep.subr.bf16.mxu0 0
      %537 = vmatpush1.bf16.msra.mxu0 0
      %538 = vmatprep.subr.bf16.mxu0 0
      %539 = vmatpush1.bf16.msra.mxu0 0
      %540 = vmatprep.subr.bf16.mxu0 0
      %541 = vmatpush1.bf16.msra.mxu0 0
      %542 = vmatprep.subr.bf16.mxu0 0
      %543 = vmatpush1.bf16.msra.mxu0 0
      %544 = vmatprep.subr.bf16.mxu0 0
      %545 = vmatpush1.bf16.msra.mxu0 0
      %546 = vmatprep.subr.bf16.mxu0 0
      %547 = vmatpush1.bf16.msra.mxu0 0
      %548 = vmatprep.subr.bf16.mxu0 0
      %549 = vmatpush1.bf16.msra.mxu0 0
      %550 = vmatprep.subr.bf16.mxu0 0
      %551 = vmatpush1.bf16.msra.mxu0 0
      %552 = vmatprep.subr.bf16.mxu0 0
      %553 = vmatpush1.bf16.msra.mxu0 0
      %554 = vmatprep.subr.bf16.mxu0 0
      %555 = vmatpush1.bf16.msra.mxu0 0
      %556 = vmatprep.subr.bf16.mxu0 0
      %557 = vmatpush1.bf16.msra.mxu0 0
      %558 = vmatprep.subr.bf16.mxu0 0
      %559 = vmatpush1.bf16.msra.mxu0 0
      %560 = vmatprep.subr.bf16.mxu0 0
      %561 = vmatpush1.bf16.msra.mxu0 0
      %562 = vmatprep.mubr.bf16.mxu0 0
      %563 = vmatmul.mubr.bf16.gmra.mrb[0].mxu0 %v503
      %v564 = vpop.f32.mrb[0].mxu0
      %v565 = vadd.f32 0.0, %v564
      %v566 = vpop.f32.mrb[0].mxu0
      %v567 = vpop.f32.mrb[0].mxu0
      %v568 = vadd.f32 0.0, %v567
      %v569 = vpop.f32.mrb[0].mxu0
      %570 = vmatprep.mubr.bf16.mxu0 0
      %571 = vmatmul.mubr.bf16.gmra.mrb[0].mxu0 %v506
      %v572 = vpop.f32.mrb[0].mxu0
      %v573 = vadd.f32 0.0, %v572
      %v574 = vpop.f32.mrb[0].mxu0
      %v575 = vpop.f32.mrb[0].mxu0
      %v576 = vadd.f32 0.0, %v575
      %v577 = vpop.f32.mrb[0].mxu0
      %578 = vmatprep.mubr.bf16.mxu0 0
      %579 = vmatmul.mubr.bf16.gmra.mrb[0].mxu0 %v509
      %v580 = vpop.f32.mrb[0].mxu0
      %v581 = vadd.f32 0.0, %v580
      %v582 = vpop.f32.mrb[0].mxu0
      %v583 = vpop.f32.mrb[0].mxu0
      %v584 = vadd.f32 0.0, %v583
      %v585 = vpop.f32.mrb[0].mxu0
      %586 = vmatprep.mubr.bf16.mxu0 0
      %587 = vmatmul.mubr.bf16.gmra.mrb[0].mxu0 %v512
      %v588 = vpop.f32.mrb[0].mxu0
      %v589 = vadd.f32 0.0, %v588
      %v590 = vpop.f32.mrb[0].mxu0
      %v591 = vpop.f32.mrb[0].mxu0
      %v592 = vadd.f32 0.0, %v591
      %v593 = vpop.f32.mrb[0].mxu0
      %594 = vmatprep.mubr.bf16.mxu0 0
      %595 = vmatmul.mubr.bf16.gmra.mrb[0].mxu0 %v515
      %v596 = vpop.f32.mrb[0].mxu0
      %v597 = vadd.f32 0.0, %v596
      %v598 = vpop.f32.mrb[0].mxu0
      %v599 = vpop.f32.mrb[0].mxu0
      %v600 = vadd.f32 0.0, %v599
      %v601 = vpop.f32.mrb[0].mxu0
      %602 = vmatprep.mubr.bf16.mxu0 0
      %603 = vmatmul.mubr.bf16.gmra.mrb[0].mxu0 %v518
      %v604 = vpop.f32.mrb[0].mxu0
      %v605 = vadd.f32 0.0, %v604
      %v606 = vpop.f32.mrb[0].mxu0
      %v607 = vpop.f32.mrb[0].mxu0
      %v608 = vadd.f32 0.0, %v607
      %v609 = vpop.f32.mrb[0].mxu0
      %610 = vmatprep.mubr.bf16.mxu0 0
      %611 = vmatmul.mubr.bf16.gmra.mrb[0].mxu0 %v521
      %v612 = vpop.f32.mrb[0].mxu0
      %v613 = vadd.f32 0.0, %v612
      %v614 = vpop.f32.mrb[0].mxu0
      %v615 = vpop.f32.mrb[0].mxu0
      %v616 = vadd.f32 0.0, %v615
      %v617 = vpop.f32.mrb[0].mxu0
      %618 = vmatprep.mubr.bf16.mxu0 0
      %619 = vmatmul.mubr.bf16.gmra.mrb[0].mxu0 %v524
      %v620 = vpop.f32.mrb[0].mxu0
      %v621 = vadd.f32 0.0, %v620
      %v622 = vpop.f32.mrb[0].mxu0
      %v623 = vpop.f32.mrb[0].mxu0
      %v624 = vadd.f32 0.0, %v623
      %v625 = vpop.f32.mrb[0].mxu0
      %626 = vdwg.mxu0
      %v643 = vunpack.c.l.b16 %v258
      %v644 = vunpack.c.l.b16 %v259
      %v645 = vunpack.c.l.b16 %v261
      %v646 = vunpack.c.l.b16 %v262
      %v647 = vunpack.c.l.b16 %v264
      %v648 = vunpack.c.l.b16 %v265
      %v649 = vunpack.c.l.b16 %v267
      %v650 = vunpack.c.l.b16 %v268
      %v651 = vunpack.c.l.b16 %v270
      %v652 = vunpack.c.l.b16 %v271
      %v653 = vunpack.c.l.b16 %v273
      %v654 = vunpack.c.l.b16 %v274
      %v655 = vunpack.c.l.b16 %v276
      %v656 = vunpack.c.l.b16 %v277
      %v657 = vunpack.c.l.b16 %v279
      %v658 = vunpack.c.l.b16 %v280
      %v659 = vpack.c.b16 %v644, %v643
      %v660 = vpack.c.b16 %v646, %v645
      %v661 = vpack.c.b16 %v648, %v647
      %v662 = vpack.c.b16 %v650, %v649
      %v663 = vpack.c.b16 %v652, %v651
      %v664 = vpack.c.b16 %v654, %v653
      %v665 = vpack.c.b16 %v656, %v655
      %v666 = vpack.c.b16 %v658, %v657
      %v668 = vsel %vm501, %v659, 0
      %v671 = vsel %vm501, %v660, 0
      %v674 = vsel %vm501, %v661, 0
      %v677 = vsel %vm501, %v662, 0
      %v680 = vsel %vm501, %v663, 0
      %v683 = vsel %vm501, %v664, 0
      %v686 = vsel %vm501, %v665, 0
      %v689 = vsel %vm501, %v666, 0
      %v692 = vsel %vm526, %v246, 0
      %694 = vmatprep.subr.bf16.mxu0 0
      %695 = vmatpush1.bf16.msra.mxu0 %v692
      %696 = vmatprep.subr.bf16.mxu0 0
      %697 = vmatpush1.bf16.msra.mxu0 0
      %698 = vmatprep.subr.bf16.mxu0 0
      %699 = vmatpush1.bf16.msra.mxu0 0
      %700 = vmatprep.subr.bf16.mxu0 0
      %701 = vmatpush1.bf16.msra.mxu0 0
      %702 = vmatprep.subr.bf16.mxu0 0
      %703 = vmatpush1.bf16.msra.mxu0 0
      %704 = vmatprep.subr.bf16.mxu0 0
      %705 = vmatpush1.bf16.msra.mxu0 0
      %706 = vmatprep.subr.bf16.mxu0 0
      %707 = vmatpush1.bf16.msra.mxu0 0
      %708 = vmatprep.subr.bf16.mxu0 0
      %709 = vmatpush1.bf16.msra.mxu0 0
      %710 = vmatprep.subr.bf16.mxu0 0
      %711 = vmatpush1.bf16.msra.mxu0 0
      %712 = vmatprep.subr.bf16.mxu0 0
      %713 = vmatpush1.bf16.msra.mxu0 0
      %714 = vmatprep.subr.bf16.mxu0 0
      %715 = vmatpush1.bf16.msra.mxu0 0
      %716 = vmatprep.subr.bf16.mxu0 0
      %717 = vmatpush1.bf16.msra.mxu0 0
      %718 = vmatprep.subr.bf16.mxu0 0
      %719 = vmatpush1.bf16.msra.mxu0 0
      %720 = vmatprep.subr.bf16.mxu0 0
      %721 = vmatpush1.bf16.msra.mxu0 0
      %722 = vmatprep.subr.bf16.mxu0 0
      %723 = vmatpush1.bf16.msra.mxu0 0
      %724 = vmatprep.subr.bf16.mxu0 0
      %725 = vmatpush1.bf16.msra.mxu0 0
      %726 = vmatprep.mubr.bf16.mxu0 0
      %727 = vmatmul.mubr.bf16.gmra.mrb[0].mxu0 %v668
      %v728 = vpop.f32.mrb[0].mxu0
      %v729 = vadd.f32 %v565, %v728
      %v730 = vpop.f32.mrb[0].mxu0
      %v731 = vpop.f32.mrb[0].mxu0
      %v732 = vadd.f32 %v568, %v731
      %v733 = vpop.f32.mrb[0].mxu0
      %734 = vmatprep.mubr.bf16.mxu0 0
      %735 = vmatmul.mubr.bf16.gmra.mrb[0].mxu0 %v671
      %v736 = vpop.f32.mrb[0].mxu0
      %v737 = vadd.f32 %v573, %v736
      %v738 = vpop.f32.mrb[0].mxu0
      %v739 = vpop.f32.mrb[0].mxu0
      %v740 = vadd.f32 %v576, %v739
      %v741 = vpop.f32.mrb[0].mxu0
      %742 = vmatprep.mubr.bf16.mxu0 0
      %743 = vmatmul.mubr.bf16.gmra.mrb[0].mxu0 %v674
      %v744 = vpop.f32.mrb[0].mxu0
      %v745 = vadd.f32 %v581, %v744
      %v746 = vpop.f32.mrb[0].mxu0
      %v747 = vpop.f32.mrb[0].mxu0
      %v748 = vadd.f32 %v584, %v747
      %v749 = vpop.f32.mrb[0].mxu0
      %750 = vmatprep.mubr.bf16.mxu0 0
      %751 = vmatmul.mubr.bf16.gmra.mrb[0].mxu0 %v677
      %v752 = vpop.f32.mrb[0].mxu0
      %v753 = vadd.f32 %v589, %v752
      %v754 = vpop.f32.mrb[0].mxu0
      %v755 = vpop.f32.mrb[0].mxu0
      %v756 = vadd.f32 %v592, %v755
      %v757 = vpop.f32.mrb[0].mxu0
      %758 = vmatprep.mubr.bf16.mxu0 0
      %759 = vmatmul.mubr.bf16.gmra.mrb[0].mxu0 %v680
      %v760 = vpop.f32.mrb[0].mxu0
      %v761 = vadd.f32 %v597, %v760
      %v762 = vpop.f32.mrb[0].mxu0
      %v763 = vpop.f32.mrb[0].mxu0
      %v764 = vadd.f32 %v600, %v763
      %v765 = vpop.f32.mrb[0].mxu0
      %766 = vmatprep.mubr.bf16.mxu0 0
      %767 = vmatmul.mubr.bf16.gmra.mrb[0].mxu0 %v683
      %v768 = vpop.f32.mrb[0].mxu0
      %v769 = vadd.f32 %v605, %v768
      %v770 = vpop.f32.mrb[0].mxu0
      %v771 = vpop.f32.mrb[0].mxu0
      %v772 = vadd.f32 %v608, %v771
      %v773 = vpop.f32.mrb[0].mxu0
      %774 = vmatprep.mubr.bf16.mxu0 0
      %775 = vmatmul.mubr.bf16.gmra.mrb[0].mxu0 %v686
      %v776 = vpop.f32.mrb[0].mxu0
      %v777 = vadd.f32 %v613, %v776
      %v778 = vpop.f32.mrb[0].mxu0
      %v779 = vpop.f32.mrb[0].mxu0
      %v780 = vadd.f32 %v616, %v779
      %v781 = vpop.f32.mrb[0].mxu0
      %782 = vmatprep.mubr.bf16.mxu0 0
      %783 = vmatmul.mubr.bf16.gmra.mrb[0].mxu0 %v689
      %v784 = vpop.f32.mrb[0].mxu0
      %v785 = vadd.f32 %v621, %v784
      %v786 = vpop.f32.mrb[0].mxu0
      %v787 = vpop.f32.mrb[0].mxu0
      %v788 = vadd.f32 %v624, %v787
      %v789 = vpop.f32.mrb[0].mxu0
      %790 = vdwg.mxu0
      %vm799 = vcmask 1042432
      %vm800 = vcmask 1046532
      %vm801 = vmor %vm799, %vm800
      %v802 = vrot.slane %v258, 5
      %v803 = vrot.slane %v802, 4
      %v804 = vrot.slane %v259, 5
      %v805 = vsel %vm801, %v803, %v804
      %v806 = vrot.slane %v804, 4
      %v807 = vrot.slane %v260, 5
      %v808 = vsel %vm801, %v806, %v807
      %v809 = vrot.slane %v261, 5
      %v810 = vrot.slane %v809, 4
      %v811 = vrot.slane %v262, 5
      %v812 = vsel %vm801, %v810, %v811
      %v813 = vrot.slane %v811, 4
      %v814 = vrot.slane %v263, 5
      %v815 = vsel %vm801, %v813, %v814
      %v816 = vrot.slane %v264, 5
      %v817 = vrot.slane %v816, 4
      %v818 = vrot.slane %v265, 5
      %v819 = vsel %vm801, %v817, %v818
      %v820 = vrot.slane %v818, 4
      %v821 = vrot.slane %v266, 5
      %v822 = vsel %vm801, %v820, %v821
      %v823 = vrot.slane %v267, 5
      %v824 = vrot.slane %v823, 4
      %v825 = vrot.slane %v268, 5
      %v826 = vsel %vm801, %v824, %v825
      %v827 = vrot.slane %v825, 4
      %v828 = vrot.slane %v269, 5
      %v829 = vsel %vm801, %v827, %v828
      %v830 = vrot.slane %v270, 5
      %v831 = vrot.slane %v830, 4
      %v832 = vrot.slane %v271, 5
      %v833 = vsel %vm801, %v831, %v832
      %v834 = vrot.slane %v832, 4
      %v835 = vrot.slane %v272, 5
      %v836 = vsel %vm801, %v834, %v835
      %v837 = vrot.slane %v273, 5
      %v838 = vrot.slane %v837, 4
      %v839 = vrot.slane %v274, 5
      %v840 = vsel %vm801, %v838, %v839
      %v841 = vrot.slane %v839, 4
      %v842 = vrot.slane %v275, 5
      %v843 = vsel %vm801, %v841, %v842
      %v844 = vrot.slane %v276, 5
      %v845 = vrot.slane %v844, 4
      %v846 = vrot.slane %v277, 5
      %v847 = vsel %vm801, %v845, %v846
      %v848 = vrot.slane %v846, 4
      %v849 = vrot.slane %v278, 5
      %v850 = vsel %vm801, %v848, %v849
      %v851 = vrot.slane %v279, 5
      %v852 = vrot.slane %v851, 4
      %v853 = vrot.slane %v280, 5
      %v854 = vsel %vm801, %v852, %v853
      %v855 = vrot.slane %v853, 4
      %v856 = vrot.slane %v281, 5
      %v857 = vsel %vm801, %v855, %v856
      %v858 = vunpack.c.l.b16 %v805
      %v859 = vunpack.c.l.b16 %v808
      %v860 = vunpack.c.l.b16 %v812
      %v861 = vunpack.c.l.b16 %v815
      %v862 = vunpack.c.l.b16 %v819
      %v863 = vunpack.c.l.b16 %v822
      %v864 = vunpack.c.l.b16 %v826
      %v865 = vunpack.c.l.b16 %v829
      %v866 = vunpack.c.l.b16 %v833
      %v867 = vunpack.c.l.b16 %v836
      %v868 = vunpack.c.l.b16 %v840
      %v869 = vunpack.c.l.b16 %v843
      %v870 = vunpack.c.l.b16 %v847
      %v871 = vunpack.c.l.b16 %v850
      %v872 = vunpack.c.l.b16 %v854
      %v873 = vunpack.c.l.b16 %v857
      %v874 = vpack.c.b16 %v859, %v858
      %v875 = vpack.c.b16 %v861, %v860
      %v876 = vpack.c.b16 %v863, %v862
      %v877 = vpack.c.b16 %v865, %v864
      %v878 = vpack.c.b16 %v867, %v866
      %v879 = vpack.c.b16 %v869, %v868
      %v880 = vpack.c.b16 %v871, %v870
      %v881 = vpack.c.b16 %v873, %v872
      %v883 = vsel %vm501, %v874, 0
      %v886 = vsel %vm501, %v875, 0
      %v889 = vsel %vm501, %v876, 0
      %v892 = vsel %vm501, %v877, 0
      %v895 = vsel %vm501, %v878, 0
      %v898 = vsel %vm501, %v879, 0
      %v901 = vsel %vm501, %v880, 0
      %v904 = vsel %vm501, %v881, 0
      %v907 = vsel %vm526, %v248, 0
      %909 = vmatprep.subr.bf16.mxu0 0
      %910 = vmatpush1.bf16.msra.mxu0 %v907
      %911 = vmatprep.subr.bf16.mxu0 0
      %912 = vmatpush1.bf16.msra.mxu0 0
      %913 = vmatprep.subr.bf16.mxu0 0
      %914 = vmatpush1.bf16.msra.mxu0 0
      %915 = vmatprep.subr.bf16.mxu0 0
      %916 = vmatpush1.bf16.msra.mxu0 0
      %917 = vmatprep.subr.bf16.mxu0 0
      %918 = vmatpush1.bf16.msra.mxu0 0
      %919 = vmatprep.subr.bf16.mxu0 0
      %920 = vmatpush1.bf16.msra.mxu0 0
      %921 = vmatprep.subr.bf16.mxu0 0
      %922 = vmatpush1.bf16.msra.mxu0 0
      %923 = vmatprep.subr.bf16.mxu0 0
      %924 = vmatpush1.bf16.msra.mxu0 0
      %925 = vmatprep.subr.bf16.mxu0 0
      %926 = vmatpush1.bf16.msra.mxu0 0
      %927 = vmatprep.subr.bf16.mxu0 0
      %928 = vmatpush1.bf16.msra.mxu0 0
      %929 = vmatprep.subr.bf16.mxu0 0
      %930 = vmatpush1.bf16.msra.mxu0 0
      %931 = vmatprep.subr.bf16.mxu0 0
      %932 = vmatpush1.bf16.msra.mxu0 0
      %933 = vmatprep.subr.bf16.mxu0 0
      %934 = vmatpush1.bf16.msra.mxu0 0
      %935 = vmatprep.subr.bf16.mxu0 0
      %936 = vmatpush1.bf16.msra.mxu0 0
      %937 = vmatprep.subr.bf16.mxu0 0
      %938 = vmatpush1.bf16.msra.mxu0 0
      %939 = vmatprep.subr.bf16.mxu0 0
      %940 = vmatpush1.bf16.msra.mxu0 0
      %941 = vmatprep.mubr.bf16.mxu0 0
      %942 = vmatmul.mubr.bf16.gmra.mrb[0].mxu0 %v883
      %v943 = vpop.f32.mrb[0].mxu0
      %v944 = vadd.f32 0.0, %v943
      %v945 = vpop.f32.mrb[0].mxu0
      %v946 = vpop.f32.mrb[0].mxu0
      %v947 = vadd.f32 0.0, %v946
      %v948 = vpop.f32.mrb[0].mxu0
      %949 = vmatprep.mubr.bf16.mxu0 0
      %950 = vmatmul.mubr.bf16.gmra.mrb[0].mxu0 %v886
      %v951 = vpop.f32.mrb[0].mxu0
      %v952 = vadd.f32 0.0, %v951
      %v953 = vpop.f32.mrb[0].mxu0
      %v954 = vpop.f32.mrb[0].mxu0
      %v955 = vadd.f32 0.0, %v954
      %v956 = vpop.f32.mrb[0].mxu0
      %957 = vmatprep.mubr.bf16.mxu0 0
      %958 = vmatmul.mubr.bf16.gmra.mrb[0].mxu0 %v889
      %v959 = vpop.f32.mrb[0].mxu0
      %v960 = vadd.f32 0.0, %v959
      %v961 = vpop.f32.mrb[0].mxu0
      %v962 = vpop.f32.mrb[0].mxu0
      %v963 = vadd.f32 0.0, %v962
      %v964 = vpop.f32.mrb[0].mxu0
      %965 = vmatprep.mubr.bf16.mxu0 0
      %966 = vmatmul.mubr.bf16.gmra.mrb[0].mxu0 %v892
      %v967 = vpop.f32.mrb[0].mxu0
      %v968 = vadd.f32 0.0, %v967
      %v969 = vpop.f32.mrb[0].mxu0
      %v970 = vpop.f32.mrb[0].mxu0
      %v971 = vadd.f32 0.0, %v970
      %v972 = vpop.f32.mrb[0].mxu0
      %973 = vmatprep.mubr.bf16.mxu0 0
      %974 = vmatmul.mubr.bf16.gmra.mrb[0].mxu0 %v895
      %v975 = vpop.f32.mrb[0].mxu0
      %v976 = vadd.f32 0.0, %v975
      %v977 = vpop.f32.mrb[0].mxu0
      %v978 = vpop.f32.mrb[0].mxu0
      %v979 = vadd.f32 0.0, %v978
      %v980 = vpop.f32.mrb[0].mxu0
      %981 = vmatprep.mubr.bf16.mxu0 0
      %982 = vmatmul.mubr.bf16.gmra.mrb[0].mxu0 %v898
      %v983 = vpop.f32.mrb[0].mxu0
      %v984 = vadd.f32 0.0, %v983
      %v985 = vpop.f32.mrb[0].mxu0
      %v986 = vpop.f32.mrb[0].mxu0
      %v987 = vadd.f32 0.0, %v986
      %v988 = vpop.f32.mrb[0].mxu0
      %989 = vmatprep.mubr.bf16.mxu0 0
      %990 = vmatmul.mubr.bf16.gmra.mrb[0].mxu0 %v901
      %v991 = vpop.f32.mrb[0].mxu0
      %v992 = vadd.f32 0.0, %v991
      %v993 = vpop.f32.mrb[0].mxu0
      %v994 = vpop.f32.mrb[0].mxu0
      %v995 = vadd.f32 0.0, %v994
      %v996 = vpop.f32.mrb[0].mxu0
      %997 = vmatprep.mubr.bf16.mxu0 0
      %998 = vmatmul.mubr.bf16.gmra.mrb[0].mxu0 %v904
      %v999 = vpop.f32.mrb[0].mxu0
      %v1000 = vadd.f32 0.0, %v999
      %v1001 = vpop.f32.mrb[0].mxu0
      %v1002 = vpop.f32.mrb[0].mxu0
      %v1003 = vadd.f32 0.0, %v1002
      %v1004 = vpop.f32.mrb[0].mxu0
      %1005 = vdwg.mxu0
      %v1006 = vadd.f32 %v729, %v944
      %v1007 = vadd.f32 %v732, %v947
      %v1008 = vadd.f32 %v737, %v952
      %v1009 = vadd.f32 %v740, %v955
      %v1010 = vadd.f32 %v745, %v960
      %v1011 = vadd.f32 %v748, %v963
      %v1012 = vadd.f32 %v753, %v968
      %v1013 = vadd.f32 %v756, %v971
      %v1014 = vadd.f32 %v761, %v976
      %v1015 = vadd.f32 %v764, %v979
      %v1016 = vadd.f32 %v769, %v984
      %v1017 = vadd.f32 %v772, %v987
      %v1018 = vadd.f32 %v777, %v992
      %v1019 = vadd.f32 %v780, %v995
      %v1020 = vadd.f32 %v785, %v1000
      %v1021 = vadd.f32 %v788, %v1003
      %s1022 = sadd.s32 %s245, 1
      %s1023 = smul.u32 %s1022, 3
      %s1024 = smul.addr %s1023, 4
      %s1025 = scalar_lea.vmem %s224, %s1024
      %v1026 = vld [vmem:[%s1025] sm:$0xf]
      %v1027 = vld [vmem:[%s1025 + $0x4] sm:$0xf]
      %v1028 = vld [vmem:[%s1025 + $0x8] sm:$0x1]
      %v1029 = vld [vmem:[%s1025 + $0xc] sm:$0xf]
      %v1030 = vld [vmem:[%s1025 + $0x10] sm:$0xf]
      %v1031 = vld [vmem:[%s1025 + $0x14] sm:$0x1]
      %v1032 = vld [vmem:[%s1025 + $0x18] sm:$0xf]
      %v1033 = vld [vmem:[%s1025 + $0x1c] sm:$0xf]
      %v1034 = vld [vmem:[%s1025 + $0x20] sm:$0x1]
      %v1035 = vld [vmem:[%s1025 + $0x24] sm:$0xf]
      %v1036 = vld [vmem:[%s1025 + $0x28] sm:$0xf]
      %v1037 = vld [vmem:[%s1025 + $0x2c] sm:$0x1]
      %v1038 = vld [vmem:[%s1025 + $0x30] sm:$0xf]
      %v1039 = vld [vmem:[%s1025 + $0x34] sm:$0xf]
      %v1040 = vld [vmem:[%s1025 + $0x38] sm:$0x1]
      %v1041 = vld [vmem:[%s1025 + $0x3c] sm:$0xf]
      %v1042 = vld [vmem:[%s1025 + $0x40] sm:$0xf]
      %v1043 = vld [vmem:[%s1025 + $0x44] sm:$0x1]
      %v1044 = vld [vmem:[%s1025 + $0x48] sm:$0xf]
      %v1045 = vld [vmem:[%s1025 + $0x4c] sm:$0xf]
      %v1046 = vld [vmem:[%s1025 + $0x50] sm:$0x1]
      %v1047 = vld [vmem:[%s1025 + $0x54] sm:$0xf]
      %v1048 = vld [vmem:[%s1025 + $0x58] sm:$0xf]
      %v1049 = vld [vmem:[%s1025 + $0x5c] sm:$0x1]
      %v1066 = vunpack.c.l.b16 %v1026
      %v1067 = vunpack.c.l.b16 %v1027
      %v1068 = vunpack.c.l.b16 %v1029
      %v1069 = vunpack.c.l.b16 %v1030
      %v1070 = vunpack.c.l.b16 %v1032
      %v1071 = vunpack.c.l.b16 %v1033
      %v1072 = vunpack.c.l.b16 %v1035
      %v1073 = vunpack.c.l.b16 %v1036
      %v1074 = vunpack.c.l.b16 %v1038
      %v1075 = vunpack.c.l.b16 %v1039
      %v1076 = vunpack.c.l.b16 %v1041
      %v1077 = vunpack.c.l.b16 %v1042
      %v1078 = vunpack.c.l.b16 %v1044
      %v1079 = vunpack.c.l.b16 %v1045
      %v1080 = vunpack.c.l.b16 %v1047
      %v1081 = vunpack.c.l.b16 %v1048
      %v1082 = vpack.c.b16 %v1067, %v1066
      %v1083 = vpack.c.b16 %v1069, %v1068
      %v1084 = vpack.c.b16 %v1071, %v1070
      %v1085 = vpack.c.b16 %v1073, %v1072
      %v1086 = vpack.c.b16 %v1075, %v1074
      %v1087 = vpack.c.b16 %v1077, %v1076
      %v1088 = vpack.c.b16 %v1079, %v1078
      %v1089 = vpack.c.b16 %v1081, %v1080
      %v1091 = vsel %vm501, %v1082, 0
      %v1094 = vsel %vm501, %v1083, 0
      %v1097 = vsel %vm501, %v1084, 0
      %v1100 = vsel %vm501, %v1085, 0
      %v1103 = vsel %vm501, %v1086, 0
      %v1106 = vsel %vm501, %v1087, 0
      %v1109 = vsel %vm501, %v1088, 0
      %v1112 = vsel %vm501, %v1089, 0
      %v1115 = vsel %vm526, %v249, 0
      %1117 = vmatprep.subr.bf16.mxu0 0
      %1118 = vmatpush1.bf16.msra.mxu0 %v1115
      %1119 = vmatprep.subr.bf16.mxu0 0
      %1120 = vmatpush1.bf16.msra.mxu0 0
      %1121 = vmatprep.subr.bf16.mxu0 0
      %1122 = vmatpush1.bf16.msra.mxu0 0
      %1123 = vmatprep.subr.bf16.mxu0 0
      %1124 = vmatpush1.bf16.msra.mxu0 0
      %1125 = vmatprep.subr.bf16.mxu0 0
      %1126 = vmatpush1.bf16.msra.mxu0 0
      %1127 = vmatprep.subr.bf16.mxu0 0
      %1128 = vmatpush1.bf16.msra.mxu0 0
      %1129 = vmatprep.subr.bf16.mxu0 0
      %1130 = vmatpush1.bf16.msra.mxu0 0
      %1131 = vmatprep.subr.bf16.mxu0 0
      %1132 = vmatpush1.bf16.msra.mxu0 0
      %1133 = vmatprep.subr.bf16.mxu0 0
      %1134 = vmatpush1.bf16.msra.mxu0 0
      %1135 = vmatprep.subr.bf16.mxu0 0
      %1136 = vmatpush1.bf16.msra.mxu0 0
      %1137 = vmatprep.subr.bf16.mxu0 0
      %1138 = vmatpush1.bf16.msra.mxu0 0
      %1139 = vmatprep.subr.bf16.mxu0 0
      %1140 = vmatpush1.bf16.msra.mxu0 0
      %1141 = vmatprep.subr.bf16.mxu0 0
      %1142 = vmatpush1.bf16.msra.mxu0 0
      %1143 = vmatprep.subr.bf16.mxu0 0
      %1144 = vmatpush1.bf16.msra.mxu0 0
      %1145 = vmatprep.subr.bf16.mxu0 0
      %1146 = vmatpush1.bf16.msra.mxu0 0
      %1147 = vmatprep.subr.bf16.mxu0 0
      %1148 = vmatpush1.bf16.msra.mxu0 0
      %1149 = vmatprep.mubr.bf16.mxu0 0
      %1150 = vmatmul.mubr.bf16.gmra.mrb[0].mxu0 %v1091
      %v1151 = vpop.f32.mrb[0].mxu0
      %v1152 = vadd.f32 0.0, %v1151
      %v1153 = vpop.f32.mrb[0].mxu0
      %v1154 = vpop.f32.mrb[0].mxu0
      %v1155 = vadd.f32 0.0, %v1154
      %v1156 = vpop.f32.mrb[0].mxu0
      %1157 = vmatprep.mubr.bf16.mxu0 0
      %1158 = vmatmul.mubr.bf16.gmra.mrb[0].mxu0 %v1094
      %v1159 = vpop.f32.mrb[0].mxu0
      %v1160 = vadd.f32 0.0, %v1159
      %v1161 = vpop.f32.mrb[0].mxu0
      %v1162 = vpop.f32.mrb[0].mxu0
      %v1163 = vadd.f32 0.0, %v1162
      %v1164 = vpop.f32.mrb[0].mxu0
      %1165 = vmatprep.mubr.bf16.mxu0 0
      %1166 = vmatmul.mubr.bf16.gmra.mrb[0].mxu0 %v1097
      %v1167 = vpop.f32.mrb[0].mxu0
      %v1168 = vadd.f32 0.0, %v1167
      %v1169 = vpop.f32.mrb[0].mxu0
      %v1170 = vpop.f32.mrb[0].mxu0
      %v1171 = vadd.f32 0.0, %v1170
      %v1172 = vpop.f32.mrb[0].mxu0
      %1173 = vmatprep.mubr.bf16.mxu0 0
      %1174 = vmatmul.mubr.bf16.gmra.mrb[0].mxu0 %v1100
      %v1175 = vpop.f32.mrb[0].mxu0
      %v1176 = vadd.f32 0.0, %v1175
      %v1177 = vpop.f32.mrb[0].mxu0
      %v1178 = vpop.f32.mrb[0].mxu0
      %v1179 = vadd.f32 0.0, %v1178
      %v1180 = vpop.f32.mrb[0].mxu0
      %1181 = vmatprep.mubr.bf16.mxu0 0
      %1182 = vmatmul.mubr.bf16.gmra.mrb[0].mxu0 %v1103
      %v1183 = vpop.f32.mrb[0].mxu0
      %v1184 = vadd.f32 0.0, %v1183
      %v1185 = vpop.f32.mrb[0].mxu0
      %v1186 = vpop.f32.mrb[0].mxu0
      %v1187 = vadd.f32 0.0, %v1186
      %v1188 = vpop.f32.mrb[0].mxu0
      %1189 = vmatprep.mubr.bf16.mxu0 0
      %1190 = vmatmul.mubr.bf16.gmra.mrb[0].mxu0 %v1106
      %v1191 = vpop.f32.mrb[0].mxu0
      %v1192 = vadd.f32 0.0, %v1191
      %v1193 = vpop.f32.mrb[0].mxu0
      %v1194 = vpop.f32.mrb[0].mxu0
      %v1195 = vadd.f32 0.0, %v1194
      %v1196 = vpop.f32.mrb[0].mxu0
      %1197 = vmatprep.mubr.bf16.mxu0 0
      %1198 = vmatmul.mubr.bf16.gmra.mrb[0].mxu0 %v1109
      %v1199 = vpop.f32.mrb[0].mxu0
      %v1200 = vadd.f32 0.0, %v1199
      %v1201 = vpop.f32.mrb[0].mxu0
      %v1202 = vpop.f32.mrb[0].mxu0
      %v1203 = vadd.f32 0.0, %v1202
      %v1204 = vpop.f32.mrb[0].mxu0
      %1205 = vmatprep.mubr.bf16.mxu0 0
      %1206 = vmatmul.mubr.bf16.gmra.mrb[0].mxu0 %v1112
      %v1207 = vpop.f32.mrb[0].mxu0
      %v1208 = vadd.f32 0.0, %v1207
      %v1209 = vpop.f32.mrb[0].mxu0
      %v1210 = vpop.f32.mrb[0].mxu0
      %v1211 = vadd.f32 0.0, %v1210
      %v1212 = vpop.f32.mrb[0].mxu0
      %1213 = vdwg.mxu0
      %v1214 = vadd.f32 %v1006, %v1152
      %v1215 = vadd.f32 %v1007, %v1155
      %v1216 = vadd.f32 %v1008, %v1160
      %v1217 = vadd.f32 %v1009, %v1163
      %v1218 = vadd.f32 %v1010, %v1168
      %v1219 = vadd.f32 %v1011, %v1171
      %v1220 = vadd.f32 %v1012, %v1176
      %v1221 = vadd.f32 %v1013, %v1179
      %v1222 = vadd.f32 %v1014, %v1184
      %v1223 = vadd.f32 %v1015, %v1187
      %v1224 = vadd.f32 %v1016, %v1192
      %v1225 = vadd.f32 %v1017, %v1195
      %v1226 = vadd.f32 %v1018, %v1200
      %v1227 = vadd.f32 %v1019, %v1203
      %v1228 = vadd.f32 %v1020, %v1208
      %v1229 = vadd.f32 %v1021, %v1211
      %v1231 = vshrl.u32 %v1026, 16
      %v1233 = vrot.slane %v1231, 4
      %v1234 = vshll.u32 %v1026, 16
      %v1236 = vrot.slane %v1234, 5
      %v1237 = vor.u32 %v1233, %v1236
      %v1238 = vrot.slane %v1237, 4
      %v1240 = vshll.u32 %v1027, 16
      %v1242 = vrot.slane %v1240, 5
      %v1243 = vsel %vm284, %v1238, %v1242
      %v1244 = vshrl.u32 %v1027, 16
      %v1246 = vrot.slane %v1244, 4
      %v1247 = vor.u32 %v1246, %v1242
      %v1248 = vrot.slane %v1247, 4
      %v1250 = vshll.u32 %v1028, 16
      %v1252 = vrot.slane %v1250, 5
      %v1253 = vsel %vm284, %v1248, %v1252
      %v1255 = vshrl.u32 %v1029, 16
      %v1257 = vrot.slane %v1255, 4
      %v1258 = vshll.u32 %v1029, 16
      %v1260 = vrot.slane %v1258, 5
      %v1261 = vor.u32 %v1257, %v1260
      %v1262 = vrot.slane %v1261, 4
      %v1264 = vshll.u32 %v1030, 16
      %v1266 = vrot.slane %v1264, 5
      %v1267 = vsel %vm284, %v1262, %v1266
      %v1268 = vshrl.u32 %v1030, 16
      %v1270 = vrot.slane %v1268, 4
      %v1271 = vor.u32 %v1270, %v1266
      %v1272 = vrot.slane %v1271, 4
      %v1274 = vshll.u32 %v1031, 16
      %v1276 = vrot.slane %v1274, 5
      %v1277 = vsel %vm284, %v1272, %v1276
      %v1279 = vshrl.u32 %v1032, 16
      %v1281 = vrot.slane %v1279, 4
      %v1282 = vshll.u32 %v1032, 16
      %v1284 = vrot.slane %v1282, 5
      %v1285 = vor.u32 %v1281, %v1284
      %v1286 = vrot.slane %v1285, 4
      %v1288 = vshll.u32 %v1033, 16
      %v1290 = vrot.slane %v1288, 5
      %v1291 = vsel %vm284, %v1286, %v1290
      %v1292 = vshrl.u32 %v1033, 16
      %v1294 = vrot.slane %v1292, 4
      %v1295 = vor.u32 %v1294, %v1290
      %v1296 = vrot.slane %v1295, 4
      %v1298 = vshll.u32 %v1034, 16
      %v1300 = vrot.slane %v1298, 5
      %v1301 = vsel %vm284, %v1296, %v1300
      %v1303 = vshrl.u32 %v1035, 16
      %v1305 = vrot.slane %v1303, 4
      %v1306 = vshll.u32 %v1035, 16
      %v1308 = vrot.slane %v1306, 5
      %v1309 = vor.u32 %v1305, %v1308
      %v1310 = vrot.slane %v1309, 4
      %v1312 = vshll.u32 %v1036, 16
      %v1314 = vrot.slane %v1312, 5
      %v1315 = vsel %vm284, %v1310, %v1314
      %v1316 = vshrl.u32 %v1036, 16
      %v1318 = vrot.slane %v1316, 4
      %v1319 = vor.u32 %v1318, %v1314
      %v1320 = vrot.slane %v1319, 4
      %v1322 = vshll.u32 %v1037, 16
      %v1324 = vrot.slane %v1322, 5
      %v1325 = vsel %vm284, %v1320, %v1324
      %v1327 = vshrl.u32 %v1038, 16
      %v1329 = vrot.slane %v1327, 4
      %v1330 = vshll.u32 %v1038, 16
      %v1332 = vrot.slane %v1330, 5
      %v1333 = vor.u32 %v1329, %v1332
      %v1334 = vrot.slane %v1333, 4
      %v1336 = vshll.u32 %v1039, 16
      %v1338 = vrot.slane %v1336, 5
      %v1339 = vsel %vm284, %v1334, %v1338
      %v1340 = vshrl.u32 %v1039, 16
      %v1342 = vrot.slane %v1340, 4
      %v1343 = vor.u32 %v1342, %v1338
      %v1344 = vrot.slane %v1343, 4
      %v1346 = vshll.u32 %v1040, 16
      %v1348 = vrot.slane %v1346, 5
      %v1349 = vsel %vm284, %v1344, %v1348
      %v1351 = vshrl.u32 %v1041, 16
      %v1353 = vrot.slane %v1351, 4
      %v1354 = vshll.u32 %v1041, 16
      %v1356 = vrot.slane %v1354, 5
      %v1357 = vor.u32 %v1353, %v1356
      %v1358 = vrot.slane %v1357, 4
      %v1360 = vshll.u32 %v1042, 16
      %v1362 = vrot.slane %v1360, 5
      %v1363 = vsel %vm284, %v1358, %v1362
      %v1364 = vshrl.u32 %v1042, 16
      %v1366 = vrot.slane %v1364, 4
      %v1367 = vor.u32 %v1366, %v1362
      %v1368 = vrot.slane %v1367, 4
      %v1370 = vshll.u32 %v1043, 16
      %v1372 = vrot.slane %v1370, 5
      %v1373 = vsel %vm284, %v1368, %v1372
      %v1375 = vshrl.u32 %v1044, 16
      %v1377 = vrot.slane %v1375, 4
      %v1378 = vshll.u32 %v1044, 16
      %v1380 = vrot.slane %v1378, 5
      %v1381 = vor.u32 %v1377, %v1380
      %v1382 = vrot.slane %v1381, 4
      %v1384 = vshll.u32 %v1045, 16
      %v1386 = vrot.slane %v1384, 5
      %v1387 = vsel %vm284, %v1382, %v1386
      %v1388 = vshrl.u32 %v1045, 16
      %v1390 = vrot.slane %v1388, 4
      %v1391 = vor.u32 %v1390, %v1386
      %v1392 = vrot.slane %v1391, 4
      %v1394 = vshll.u32 %v1046, 16
      %v1396 = vrot.slane %v1394, 5
      %v1397 = vsel %vm284, %v1392, %v1396
      %v1399 = vshrl.u32 %v1047, 16
      %v1401 = vrot.slane %v1399, 4
      %v1402 = vshll.u32 %v1047, 16
      %v1404 = vrot.slane %v1402, 5
      %v1405 = vor.u32 %v1401, %v1404
      %v1406 = vrot.slane %v1405, 4
      %v1408 = vshll.u32 %v1048, 16
      %v1410 = vrot.slane %v1408, 5
      %v1411 = vsel %vm284, %v1406, %v1410
      %v1412 = vshrl.u32 %v1048, 16
      %v1414 = vrot.slane %v1412, 4
      %v1415 = vor.u32 %v1414, %v1410
      %v1416 = vrot.slane %v1415, 4
      %v1418 = vshll.u32 %v1049, 16
      %v1420 = vrot.slane %v1418, 5
      %v1421 = vsel %vm284, %v1416, %v1420
      %v1422 = vunpack.c.l.b16 %v1243
      %v1423 = vunpack.c.l.b16 %v1253
      %v1424 = vunpack.c.l.b16 %v1267
      %v1425 = vunpack.c.l.b16 %v1277
      %v1426 = vunpack.c.l.b16 %v1291
      %v1427 = vunpack.c.l.b16 %v1301
      %v1428 = vunpack.c.l.b16 %v1315
      %v1429 = vunpack.c.l.b16 %v1325
      %v1430 = vunpack.c.l.b16 %v1339
      %v1431 = vunpack.c.l.b16 %v1349
      %v1432 = vunpack.c.l.b16 %v1363
      %v1433 = vunpack.c.l.b16 %v1373
      %v1434 = vunpack.c.l.b16 %v1387
      %v1435 = vunpack.c.l.b16 %v1397
      %v1436 = vunpack.c.l.b16 %v1411
      %v1437 = vunpack.c.l.b16 %v1421
      %v1438 = vpack.c.b16 %v1423, %v1422
      %v1439 = vpack.c.b16 %v1425, %v1424
      %v1440 = vpack.c.b16 %v1427, %v1426
      %v1441 = vpack.c.b16 %v1429, %v1428
      %v1442 = vpack.c.b16 %v1431, %v1430
      %v1443 = vpack.c.b16 %v1433, %v1432
      %v1444 = vpack.c.b16 %v1435, %v1434
      %v1445 = vpack.c.b16 %v1437, %v1436
      %v1447 = vsel %vm501, %v1438, 0
      %v1450 = vsel %vm501, %v1439, 0
      %v1453 = vsel %vm501, %v1440, 0
      %v1456 = vsel %vm501, %v1441, 0
      %v1459 = vsel %vm501, %v1442, 0
      %v1462 = vsel %vm501, %v1443, 0
      %v1465 = vsel %vm501, %v1444, 0
      %v1468 = vsel %vm501, %v1445, 0
      %v1471 = vsel %vm526, %v250, 0
      %1473 = vmatprep.subr.bf16.mxu0 0
      %1474 = vmatpush1.bf16.msra.mxu0 %v1471
      %1475 = vmatprep.subr.bf16.mxu0 0
      %1476 = vmatpush1.bf16.msra.mxu0 0
      %1477 = vmatprep.subr.bf16.mxu0 0
      %1478 = vmatpush1.bf16.msra.mxu0 0
      %1479 = vmatprep.subr.bf16.mxu0 0
      %1480 = vmatpush1.bf16.msra.mxu0 0
      %1481 = vmatprep.subr.bf16.mxu0 0
      %1482 = vmatpush1.bf16.msra.mxu0 0
      %1483 = vmatprep.subr.bf16.mxu0 0
      %1484 = vmatpush1.bf16.msra.mxu0 0
      %1485 = vmatprep.subr.bf16.mxu0 0
      %1486 = vmatpush1.bf16.msra.mxu0 0
      %1487 = vmatprep.subr.bf16.mxu0 0
      %1488 = vmatpush1.bf16.msra.mxu0 0
      %1489 = vmatprep.subr.bf16.mxu0 0
      %1490 = vmatpush1.bf16.msra.mxu0 0
      %1491 = vmatprep.subr.bf16.mxu0 0
      %1492 = vmatpush1.bf16.msra.mxu0 0
      %1493 = vmatprep.subr.bf16.mxu0 0
      %1494 = vmatpush1.bf16.msra.mxu0 0
      %1495 = vmatprep.subr.bf16.mxu0 0
      %1496 = vmatpush1.bf16.msra.mxu0 0
      %1497 = vmatprep.subr.bf16.mxu0 0
      %1498 = vmatpush1.bf16.msra.mxu0 0
      %1499 = vmatprep.subr.bf16.mxu0 0
      %1500 = vmatpush1.bf16.msra.mxu0 0
      %1501 = vmatprep.subr.bf16.mxu0 0
      %1502 = vmatpush1.bf16.msra.mxu0 0
      %1503 = vmatprep.subr.bf16.mxu0 0
      %1504 = vmatpush1.bf16.msra.mxu0 0
      %1505 = vmatprep.mubr.bf16.mxu0 0
      %1506 = vmatmul.mubr.bf16.gmra.mrb[0].mxu0 %v1447
      %v1507 = vpop.f32.mrb[0].mxu0
      %v1508 = vadd.f32 0.0, %v1507
      %v1509 = vpop.f32.mrb[0].mxu0
      %v1510 = vpop.f32.mrb[0].mxu0
      %v1511 = vadd.f32 0.0, %v1510
      %v1512 = vpop.f32.mrb[0].mxu0
      %1513 = vmatprep.mubr.bf16.mxu0 0
      %1514 = vmatmul.mubr.bf16.gmra.mrb[0].mxu0 %v1450
      %v1515 = vpop.f32.mrb[0].mxu0
      %v1516 = vadd.f32 0.0, %v1515
      %v1517 = vpop.f32.mrb[0].mxu0
      %v1518 = vpop.f32.mrb[0].mxu0
      %v1519 = vadd.f32 0.0, %v1518
      %v1520 = vpop.f32.mrb[0].mxu0
      %1521 = vmatprep.mubr.bf16.mxu0 0
      %1522 = vmatmul.mubr.bf16.gmra.mrb[0].mxu0 %v1453
      %v1523 = vpop.f32.mrb[0].mxu0
      %v1524 = vadd.f32 0.0, %v1523
      %v1525 = vpop.f32.mrb[0].mxu0
      %v1526 = vpop.f32.mrb[0].mxu0
      %v1527 = vadd.f32 0.0, %v1526
      %v1528 = vpop.f32.mrb[0].mxu0
      %1529 = vmatprep.mubr.bf16.mxu0 0
      %1530 = vmatmul.mubr.bf16.gmra.mrb[0].mxu0 %v1456
      %v1531 = vpop.f32.mrb[0].mxu0
      %v1532 = vadd.f32 0.0, %v1531
      %v1533 = vpop.f32.mrb[0].mxu0
      %v1534 = vpop.f32.mrb[0].mxu0
      %v1535 = vadd.f32 0.0, %v1534
      %v1536 = vpop.f32.mrb[0].mxu0
      %1537 = vmatprep.mubr.bf16.mxu0 0
      %1538 = vmatmul.mubr.bf16.gmra.mrb[0].mxu0 %v1459
      %v1539 = vpop.f32.mrb[0].mxu0
      %v1540 = vadd.f32 0.0, %v1539
      %v1541 = vpop.f32.mrb[0].mxu0
      %v1542 = vpop.f32.mrb[0].mxu0
      %v1543 = vadd.f32 0.0, %v1542
      %v1544 = vpop.f32.mrb[0].mxu0
      %1545 = vmatprep.mubr.bf16.mxu0 0
      %1546 = vmatmul.mubr.bf16.gmra.mrb[0].mxu0 %v1462
      %v1547 = vpop.f32.mrb[0].mxu0
      %v1548 = vadd.f32 0.0, %v1547
      %v1549 = vpop.f32.mrb[0].mxu0
      %v1550 = vpop.f32.mrb[0].mxu0
      %v1551 = vadd.f32 0.0, %v1550
      %v1552 = vpop.f32.mrb[0].mxu0
      %1553 = vmatprep.mubr.bf16.mxu0 0
      %1554 = vmatmul.mubr.bf16.gmra.mrb[0].mxu0 %v1465
      %v1555 = vpop.f32.mrb[0].mxu0
      %v1556 = vadd.f32 0.0, %v1555
      %v1557 = vpop.f32.mrb[0].mxu0
      %v1558 = vpop.f32.mrb[0].mxu0
      %v1559 = vadd.f32 0.0, %v1558
      %v1560 = vpop.f32.mrb[0].mxu0
      %1561 = vmatprep.mubr.bf16.mxu0 0
      %1562 = vmatmul.mubr.bf16.gmra.mrb[0].mxu0 %v1468
      %v1563 = vpop.f32.mrb[0].mxu0
      %v1564 = vadd.f32 0.0, %v1563
      %v1565 = vpop.f32.mrb[0].mxu0
      %v1566 = vpop.f32.mrb[0].mxu0
      %v1567 = vadd.f32 0.0, %v1566
      %v1568 = vpop.f32.mrb[0].mxu0
      %1569 = vdwg.mxu0
      %v1570 = vadd.f32 %v1214, %v1508
      %v1571 = vadd.f32 %v1215, %v1511
      %v1572 = vadd.f32 %v1216, %v1516
      %v1573 = vadd.f32 %v1217, %v1519
      %v1574 = vadd.f32 %v1218, %v1524
      %v1575 = vadd.f32 %v1219, %v1527
      %v1576 = vadd.f32 %v1220, %v1532
      %v1577 = vadd.f32 %v1221, %v1535
      %v1578 = vadd.f32 %v1222, %v1540
      %v1579 = vadd.f32 %v1223, %v1543
      %v1580 = vadd.f32 %v1224, %v1548
      %v1581 = vadd.f32 %v1225, %v1551
      %v1582 = vadd.f32 %v1226, %v1556
      %v1583 = vadd.f32 %v1227, %v1559
      %v1584 = vadd.f32 %v1228, %v1564
      %v1585 = vadd.f32 %v1229, %v1567
      %v1594 = vrot.slane %v1026, 5
      %v1595 = vrot.slane %v1594, 4
      %v1596 = vrot.slane %v1027, 5
      %v1597 = vsel %vm801, %v1595, %v1596
      %v1598 = vrot.slane %v1596, 4
      %v1599 = vrot.slane %v1028, 5
      %v1600 = vsel %vm801, %v1598, %v1599
      %v1601 = vrot.slane %v1029, 5
      %v1602 = vrot.slane %v1601, 4
      %v1603 = vrot.slane %v1030, 5
      %v1604 = vsel %vm801, %v1602, %v1603
      %v1605 = vrot.slane %v1603, 4
      %v1606 = vrot.slane %v1031, 5
      %v1607 = vsel %vm801, %v1605, %v1606
      %v1608 = vrot.slane %v1032, 5
      %v1609 = vrot.slane %v1608, 4
      %v1610 = vrot.slane %v1033, 5
      %v1611 = vsel %vm801, %v1609, %v1610
      %v1612 = vrot.slane %v1610, 4
      %v1613 = vrot.slane %v1034, 5
      %v1614 = vsel %vm801, %v1612, %v1613
      %v1615 = vrot.slane %v1035, 5
      %v1616 = vrot.slane %v1615, 4
      %v1617 = vrot.slane %v1036, 5
      %v1618 = vsel %vm801, %v1616, %v1617
      %v1619 = vrot.slane %v1617, 4
      %v1620 = vrot.slane %v1037, 5
      %v1621 = vsel %vm801, %v1619, %v1620
      %v1622 = vrot.slane %v1038, 5
      %v1623 = vrot.slane %v1622, 4
      %v1624 = vrot.slane %v1039, 5
      %v1625 = vsel %vm801, %v1623, %v1624
      %v1626 = vrot.slane %v1624, 4
      %v1627 = vrot.slane %v1040, 5
      %v1628 = vsel %vm801, %v1626, %v1627
      %v1629 = vrot.slane %v1041, 5
      %v1630 = vrot.slane %v1629, 4
      %v1631 = vrot.slane %v1042, 5
      %v1632 = vsel %vm801, %v1630, %v1631
      %v1633 = vrot.slane %v1631, 4
      %v1634 = vrot.slane %v1043, 5
      %v1635 = vsel %vm801, %v1633, %v1634
      %v1636 = vrot.slane %v1044, 5
      %v1637 = vrot.slane %v1636, 4
      %v1638 = vrot.slane %v1045, 5
      %v1639 = vsel %vm801, %v1637, %v1638
      %v1640 = vrot.slane %v1638, 4
      %v1641 = vrot.slane %v1046, 5
      %v1642 = vsel %vm801, %v1640, %v1641
      %v1643 = vrot.slane %v1047, 5
      %v1644 = vrot.slane %v1643, 4
      %v1645 = vrot.slane %v1048, 5
      %v1646 = vsel %vm801, %v1644, %v1645
      %v1647 = vrot.slane %v1645, 4
      %v1648 = vrot.slane %v1049, 5
      %v1649 = vsel %vm801, %v1647, %v1648
      %v1650 = vunpack.c.l.b16 %v1597
      %v1651 = vunpack.c.l.b16 %v1600
      %v1652 = vunpack.c.l.b16 %v1604
      %v1653 = vunpack.c.l.b16 %v1607
      %v1654 = vunpack.c.l.b16 %v1611
      %v1655 = vunpack.c.l.b16 %v1614
      %v1656 = vunpack.c.l.b16 %v1618
      %v1657 = vunpack.c.l.b16 %v1621
      %v1658 = vunpack.c.l.b16 %v1625
      %v1659 = vunpack.c.l.b16 %v1628
      %v1660 = vunpack.c.l.b16 %v1632
      %v1661 = vunpack.c.l.b16 %v1635
      %v1662 = vunpack.c.l.b16 %v1639
      %v1663 = vunpack.c.l.b16 %v1642
      %v1664 = vunpack.c.l.b16 %v1646
      %v1665 = vunpack.c.l.b16 %v1649
      %v1666 = vpack.c.b16 %v1651, %v1650
      %v1667 = vpack.c.b16 %v1653, %v1652
      %v1668 = vpack.c.b16 %v1655, %v1654
      %v1669 = vpack.c.b16 %v1657, %v1656
      %v1670 = vpack.c.b16 %v1659, %v1658
      %v1671 = vpack.c.b16 %v1661, %v1660
      %v1672 = vpack.c.b16 %v1663, %v1662
      %v1673 = vpack.c.b16 %v1665, %v1664
      %v1675 = vsel %vm501, %v1666, 0
      %v1678 = vsel %vm501, %v1667, 0
      %v1681 = vsel %vm501, %v1668, 0
      %v1684 = vsel %vm501, %v1669, 0
      %v1687 = vsel %vm501, %v1670, 0
      %v1690 = vsel %vm501, %v1671, 0
      %v1693 = vsel %vm501, %v1672, 0
      %v1696 = vsel %vm501, %v1673, 0
      %v1699 = vsel %vm526, %v251, 0
      %1701 = vmatprep.subr.bf16.mxu0 0
      %1702 = vmatpush1.bf16.msra.mxu0 %v1699
      %1703 = vmatprep.subr.bf16.mxu0 0
      %1704 = vmatpush1.bf16.msra.mxu0 0
      %1705 = vmatprep.subr.bf16.mxu0 0
      %1706 = vmatpush1.bf16.msra.mxu0 0
      %1707 = vmatprep.subr.bf16.mxu0 0
      %1708 = vmatpush1.bf16.msra.mxu0 0
      %1709 = vmatprep.subr.bf16.mxu0 0
      %1710 = vmatpush1.bf16.msra.mxu0 0
      %1711 = vmatprep.subr.bf16.mxu0 0
      %1712 = vmatpush1.bf16.msra.mxu0 0
      %1713 = vmatprep.subr.bf16.mxu0 0
      %1714 = vmatpush1.bf16.msra.mxu0 0
      %1715 = vmatprep.subr.bf16.mxu0 0
      %1716 = vmatpush1.bf16.msra.mxu0 0
      %1717 = vmatprep.subr.bf16.mxu0 0
      %1718 = vmatpush1.bf16.msra.mxu0 0
      %1719 = vmatprep.subr.bf16.mxu0 0
      %1720 = vmatpush1.bf16.msra.mxu0 0
      %1721 = vmatprep.subr.bf16.mxu0 0
      %1722 = vmatpush1.bf16.msra.mxu0 0
      %1723 = vmatprep.subr.bf16.mxu0 0
      %1724 = vmatpush1.bf16.msra.mxu0 0
      %1725 = vmatprep.subr.bf16.mxu0 0
      %1726 = vmatpush1.bf16.msra.mxu0 0
      %1727 = vmatprep.subr.bf16.mxu0 0
      %1728 = vmatpush1.bf16.msra.mxu0 0
      %1729 = vmatprep.subr.bf16.mxu0 0
      %1730 = vmatpush1.bf16.msra.mxu0 0
      %1731 = vmatprep.subr.bf16.mxu0 0
      %1732 = vmatpush1.bf16.msra.mxu0 0
      %1733 = vmatprep.mubr.bf16.mxu0 0
      %1734 = vmatmul.mubr.bf16.gmra.mrb[0].mxu0 %v1675
      %v1735 = vpop.f32.mrb[0].mxu0
      %v1736 = vadd.f32 0.0, %v1735
      %v1737 = vpop.f32.mrb[0].mxu0
      %v1738 = vpop.f32.mrb[0].mxu0
      %v1739 = vadd.f32 0.0, %v1738
      %v1740 = vpop.f32.mrb[0].mxu0
      %1741 = vmatprep.mubr.bf16.mxu0 0
      %1742 = vmatmul.mubr.bf16.gmra.mrb[0].mxu0 %v1678
      %v1743 = vpop.f32.mrb[0].mxu0
      %v1744 = vadd.f32 0.0, %v1743
      %v1745 = vpop.f32.mrb[0].mxu0
      %v1746 = vpop.f32.mrb[0].mxu0
      %v1747 = vadd.f32 0.0, %v1746
      %v1748 = vpop.f32.mrb[0].mxu0
      %1749 = vmatprep.mubr.bf16.mxu0 0
      %1750 = vmatmul.mubr.bf16.gmra.mrb[0].mxu0 %v1681
      %v1751 = vpop.f32.mrb[0].mxu0
      %v1752 = vadd.f32 0.0, %v1751
      %v1753 = vpop.f32.mrb[0].mxu0
      %v1754 = vpop.f32.mrb[0].mxu0
      %v1755 = vadd.f32 0.0, %v1754
      %v1756 = vpop.f32.mrb[0].mxu0
      %1757 = vmatprep.mubr.bf16.mxu0 0
      %1758 = vmatmul.mubr.bf16.gmra.mrb[0].mxu0 %v1684
      %v1759 = vpop.f32.mrb[0].mxu0
      %v1760 = vadd.f32 0.0, %v1759
      %v1761 = vpop.f32.mrb[0].mxu0
      %v1762 = vpop.f32.mrb[0].mxu0
      %v1763 = vadd.f32 0.0, %v1762
      %v1764 = vpop.f32.mrb[0].mxu0
      %1765 = vmatprep.mubr.bf16.mxu0 0
      %1766 = vmatmul.mubr.bf16.gmra.mrb[0].mxu0 %v1687
      %v1767 = vpop.f32.mrb[0].mxu0
      %v1768 = vadd.f32 0.0, %v1767
      %v1769 = vpop.f32.mrb[0].mxu0
      %v1770 = vpop.f32.mrb[0].mxu0
      %v1771 = vadd.f32 0.0, %v1770
      %v1772 = vpop.f32.mrb[0].mxu0
      %1773 = vmatprep.mubr.bf16.mxu0 0
      %1774 = vmatmul.mubr.bf16.gmra.mrb[0].mxu0 %v1690
      %v1775 = vpop.f32.mrb[0].mxu0
      %v1776 = vadd.f32 0.0, %v1775
      %v1777 = vpop.f32.mrb[0].mxu0
      %v1778 = vpop.f32.mrb[0].mxu0
      %v1779 = vadd.f32 0.0, %v1778
      %v1780 = vpop.f32.mrb[0].mxu0
      %1781 = vmatprep.mubr.bf16.mxu0 0
      %1782 = vmatmul.mubr.bf16.gmra.mrb[0].mxu0 %v1693
      %v1783 = vpop.f32.mrb[0].mxu0
      %v1784 = vadd.f32 0.0, %v1783
      %v1785 = vpop.f32.mrb[0].mxu0
      %v1786 = vpop.f32.mrb[0].mxu0
      %v1787 = vadd.f32 0.0, %v1786
      %v1788 = vpop.f32.mrb[0].mxu0
      %1789 = vmatprep.mubr.bf16.mxu0 0
      %1790 = vmatmul.mubr.bf16.gmra.mrb[0].mxu0 %v1696
      %v1791 = vpop.f32.mrb[0].mxu0
      %v1792 = vadd.f32 0.0, %v1791
      %v1793 = vpop.f32.mrb[0].mxu0
      %v1794 = vpop.f32.mrb[0].mxu0
      %v1795 = vadd.f32 0.0, %v1794
      %v1796 = vpop.f32.mrb[0].mxu0
      %1797 = vdwg.mxu0
      %v1798 = vadd.f32 %v1570, %v1736
      %v1799 = vadd.f32 %v1571, %v1739
      %v1800 = vadd.f32 %v1572, %v1744
      %v1801 = vadd.f32 %v1573, %v1747
      %v1802 = vadd.f32 %v1574, %v1752
      %v1803 = vadd.f32 %v1575, %v1755
      %v1804 = vadd.f32 %v1576, %v1760
      %v1805 = vadd.f32 %v1577, %v1763
      %v1806 = vadd.f32 %v1578, %v1768
      %v1807 = vadd.f32 %v1579, %v1771
      %v1808 = vadd.f32 %v1580, %v1776
      %v1809 = vadd.f32 %v1581, %v1779
      %v1810 = vadd.f32 %v1582, %v1784
      %v1811 = vadd.f32 %v1583, %v1787
      %v1812 = vadd.f32 %v1584, %v1792
      %v1813 = vadd.f32 %v1585, %v1795
      %s1814 = sadd.s32 %s245, 2
      %s1815 = smul.u32 %s1814, 3
      %s1816 = smul.addr %s1815, 4
      %s1817 = scalar_lea.vmem %s224, %s1816
      %v1818 = vld [vmem:[%s1817] sm:$0xf]
      %v1819 = vld [vmem:[%s1817 + $0x4] sm:$0xf]
      %v1820 = vld [vmem:[%s1817 + $0x8] sm:$0x1]
      %v1821 = vld [vmem:[%s1817 + $0xc] sm:$0xf]
      %v1822 = vld [vmem:[%s1817 + $0x10] sm:$0xf]
      %v1823 = vld [vmem:[%s1817 + $0x14] sm:$0x1]
      %v1824 = vld [vmem:[%s1817 + $0x18] sm:$0xf]
      %v1825 = vld [vmem:[%s1817 + $0x1c] sm:$0xf]
      %v1826 = vld [vmem:[%s1817 + $0x20] sm:$0x1]
      %v1827 = vld [vmem:[%s1817 + $0x24] sm:$0xf]
      %v1828 = vld [vmem:[%s1817 + $0x28] sm:$0xf]
      %v1829 = vld [vmem:[%s1817 + $0x2c] sm:$0x1]
      %v1830 = vld [vmem:[%s1817 + $0x30] sm:$0xf]
      %v1831 = vld [vmem:[%s1817 + $0x34] sm:$0xf]
      %v1832 = vld [vmem:[%s1817 + $0x38] sm:$0x1]
      %v1833 = vld [vmem:[%s1817 + $0x3c] sm:$0xf]
      %v1834 = vld [vmem:[%s1817 + $0x40] sm:$0xf]
      %v1835 = vld [vmem:[%s1817 + $0x44] sm:$0x1]
      %v1836 = vld [vmem:[%s1817 + $0x48] sm:$0xf]
      %v1837 = vld [vmem:[%s1817 + $0x4c] sm:$0xf]
      %v1838 = vld [vmem:[%s1817 + $0x50] sm:$0x1]
      %v1839 = vld [vmem:[%s1817 + $0x54] sm:$0xf]
      %v1840 = vld [vmem:[%s1817 + $0x58] sm:$0xf]
      %v1841 = vld [vmem:[%s1817 + $0x5c] sm:$0x1]
      %v1858 = vunpack.c.l.b16 %v1818
      %v1859 = vunpack.c.l.b16 %v1819
      %v1860 = vunpack.c.l.b16 %v1821
      %v1861 = vunpack.c.l.b16 %v1822
      %v1862 = vunpack.c.l.b16 %v1824
      %v1863 = vunpack.c.l.b16 %v1825
      %v1864 = vunpack.c.l.b16 %v1827
      %v1865 = vunpack.c.l.b16 %v1828
      %v1866 = vunpack.c.l.b16 %v1830
      %v1867 = vunpack.c.l.b16 %v1831
      %v1868 = vunpack.c.l.b16 %v1833
      %v1869 = vunpack.c.l.b16 %v1834
      %v1870 = vunpack.c.l.b16 %v1836
      %v1871 = vunpack.c.l.b16 %v1837
      %v1872 = vunpack.c.l.b16 %v1839
      %v1873 = vunpack.c.l.b16 %v1840
      %v1874 = vpack.c.b16 %v1859, %v1858
      %v1875 = vpack.c.b16 %v1861, %v1860
      %v1876 = vpack.c.b16 %v1863, %v1862
      %v1877 = vpack.c.b16 %v1865, %v1864
      %v1878 = vpack.c.b16 %v1867, %v1866
      %v1879 = vpack.c.b16 %v1869, %v1868
      %v1880 = vpack.c.b16 %v1871, %v1870
      %v1881 = vpack.c.b16 %v1873, %v1872
      %v1883 = vsel %vm501, %v1874, 0
      %v1886 = vsel %vm501, %v1875, 0
      %v1889 = vsel %vm501, %v1876, 0
      %v1892 = vsel %vm501, %v1877, 0
      %v1895 = vsel %vm501, %v1878, 0
      %v1898 = vsel %vm501, %v1879, 0
      %v1901 = vsel %vm501, %v1880, 0
      %v1904 = vsel %vm501, %v1881, 0
      %v1907 = vsel %vm526, %v252, 0
      %1909 = vmatprep.subr.bf16.mxu0 0
      %1910 = vmatpush1.bf16.msra.mxu0 %v1907
      %1911 = vmatprep.subr.bf16.mxu0 0
      %1912 = vmatpush1.bf16.msra.mxu0 0
      %1913 = vmatprep.subr.bf16.mxu0 0
      %1914 = vmatpush1.bf16.msra.mxu0 0
      %1915 = vmatprep.subr.bf16.mxu0 0
      %1916 = vmatpush1.bf16.msra.mxu0 0
      %1917 = vmatprep.subr.bf16.mxu0 0
      %1918 = vmatpush1.bf16.msra.mxu0 0
      %1919 = vmatprep.subr.bf16.mxu0 0
      %1920 = vmatpush1.bf16.msra.mxu0 0
      %1921 = vmatprep.subr.bf16.mxu0 0
      %1922 = vmatpush1.bf16.msra.mxu0 0
      %1923 = vmatprep.subr.bf16.mxu0 0
      %1924 = vmatpush1.bf16.msra.mxu0 0
      %1925 = vmatprep.subr.bf16.mxu0 0
      %1926 = vmatpush1.bf16.msra.mxu0 0
      %1927 = vmatprep.subr.bf16.mxu0 0
      %1928 = vmatpush1.bf16.msra.mxu0 0
      %1929 = vmatprep.subr.bf16.mxu0 0
      %1930 = vmatpush1.bf16.msra.mxu0 0
      %1931 = vmatprep.subr.bf16.mxu0 0
      %1932 = vmatpush1.bf16.msra.mxu0 0
      %1933 = vmatprep.subr.bf16.mxu0 0
      %1934 = vmatpush1.bf16.msra.mxu0 0
      %1935 = vmatprep.subr.bf16.mxu0 0
      %1936 = vmatpush1.bf16.msra.mxu0 0
      %1937 = vmatprep.subr.bf16.mxu0 0
      %1938 = vmatpush1.bf16.msra.mxu0 0
      %1939 = vmatprep.subr.bf16.mxu0 0
      %1940 = vmatpush1.bf16.msra.mxu0 0
      %1941 = vmatprep.mubr.bf16.mxu0 0
      %1942 = vmatmul.mubr.bf16.gmra.mrb[0].mxu0 %v1883
      %v1943 = vpop.f32.mrb[0].mxu0
      %v1944 = vadd.f32 0.0, %v1943
      %v1945 = vpop.f32.mrb[0].mxu0
      %v1946 = vpop.f32.mrb[0].mxu0
      %v1947 = vadd.f32 0.0, %v1946
      %v1948 = vpop.f32.mrb[0].mxu0
      %1949 = vmatprep.mubr.bf16.mxu0 0
      %1950 = vmatmul.mubr.bf16.gmra.mrb[0].mxu0 %v1886
      %v1951 = vpop.f32.mrb[0].mxu0
      %v1952 = vadd.f32 0.0, %v1951
      %v1953 = vpop.f32.mrb[0].mxu0
      %v1954 = vpop.f32.mrb[0].mxu0
      %v1955 = vadd.f32 0.0, %v1954
      %v1956 = vpop.f32.mrb[0].mxu0
      %1957 = vmatprep.mubr.bf16.mxu0 0
      %1958 = vmatmul.mubr.bf16.gmra.mrb[0].mxu0 %v1889
      %v1959 = vpop.f32.mrb[0].mxu0
      %v1960 = vadd.f32 0.0, %v1959
      %v1961 = vpop.f32.mrb[0].mxu0
      %v1962 = vpop.f32.mrb[0].mxu0
      %v1963 = vadd.f32 0.0, %v1962
      %v1964 = vpop.f32.mrb[0].mxu0
      %1965 = vmatprep.mubr.bf16.mxu0 0
      %1966 = vmatmul.mubr.bf16.gmra.mrb[0].mxu0 %v1892
      %v1967 = vpop.f32.mrb[0].mxu0
      %v1968 = vadd.f32 0.0, %v1967
      %v1969 = vpop.f32.mrb[0].mxu0
      %v1970 = vpop.f32.mrb[0].mxu0
      %v1971 = vadd.f32 0.0, %v1970
      %v1972 = vpop.f32.mrb[0].mxu0
      %1973 = vmatprep.mubr.bf16.mxu0 0
      %1974 = vmatmul.mubr.bf16.gmra.mrb[0].mxu0 %v1895
      %v1975 = vpop.f32.mrb[0].mxu0
      %v1976 = vadd.f32 0.0, %v1975
      %v1977 = vpop.f32.mrb[0].mxu0
      %v1978 = vpop.f32.mrb[0].mxu0
      %v1979 = vadd.f32 0.0, %v1978
      %v1980 = vpop.f32.mrb[0].mxu0
      %1981 = vmatprep.mubr.bf16.mxu0 0
      %1982 = vmatmul.mubr.bf16.gmra.mrb[0].mxu0 %v1898
      %v1983 = vpop.f32.mrb[0].mxu0
      %v1984 = vadd.f32 0.0, %v1983
      %v1985 = vpop.f32.mrb[0].mxu0
      %v1986 = vpop.f32.mrb[0].mxu0
      %v1987 = vadd.f32 0.0, %v1986
      %v1988 = vpop.f32.mrb[0].mxu0
      %1989 = vmatprep.mubr.bf16.mxu0 0
      %1990 = vmatmul.mubr.bf16.gmra.mrb[0].mxu0 %v1901
      %v1991 = vpop.f32.mrb[0].mxu0
      %v1992 = vadd.f32 0.0, %v1991
      %v1993 = vpop.f32.mrb[0].mxu0
      %v1994 = vpop.f32.mrb[0].mxu0
      %v1995 = vadd.f32 0.0, %v1994
      %v1996 = vpop.f32.mrb[0].mxu0
      %1997 = vmatprep.mubr.bf16.mxu0 0
      %1998 = vmatmul.mubr.bf16.gmra.mrb[0].mxu0 %v1904
      %v1999 = vpop.f32.mrb[0].mxu0
      %v2000 = vadd.f32 0.0, %v1999
      %v2001 = vpop.f32.mrb[0].mxu0
      %v2002 = vpop.f32.mrb[0].mxu0
      %v2003 = vadd.f32 0.0, %v2002
      %v2004 = vpop.f32.mrb[0].mxu0
      %2005 = vdwg.mxu0
      %v2006 = vadd.f32 %v1798, %v1944
      %v2007 = vadd.f32 %v1799, %v1947
      %v2008 = vadd.f32 %v1800, %v1952
      %v2009 = vadd.f32 %v1801, %v1955
      %v2010 = vadd.f32 %v1802, %v1960
      %v2011 = vadd.f32 %v1803, %v1963
      %v2012 = vadd.f32 %v1804, %v1968
      %v2013 = vadd.f32 %v1805, %v1971
      %v2014 = vadd.f32 %v1806, %v1976
      %v2015 = vadd.f32 %v1807, %v1979
      %v2016 = vadd.f32 %v1808, %v1984
      %v2017 = vadd.f32 %v1809, %v1987
      %v2018 = vadd.f32 %v1810, %v1992
      %v2019 = vadd.f32 %v1811, %v1995
      %v2020 = vadd.f32 %v1812, %v2000
      %v2021 = vadd.f32 %v1813, %v2003
      %v2023 = vshrl.u32 %v1818, 16
      %v2025 = vrot.slane %v2023, 4
      %v2026 = vshll.u32 %v1818, 16
      %v2028 = vrot.slane %v2026, 5
      %v2029 = vor.u32 %v2025, %v2028
      %v2030 = vrot.slane %v2029, 4
      %v2032 = vshll.u32 %v1819, 16
      %v2034 = vrot.slane %v2032, 5
      %v2035 = vsel %vm284, %v2030, %v2034
      %v2036 = vshrl.u32 %v1819, 16
      %v2038 = vrot.slane %v2036, 4
      %v2039 = vor.u32 %v2038, %v2034
      %v2040 = vrot.slane %v2039, 4
      %v2042 = vshll.u32 %v1820, 16
      %v2044 = vrot.slane %v2042, 5
      %v2045 = vsel %vm284, %v2040, %v2044
      %v2047 = vshrl.u32 %v1821, 16
      %v2049 = vrot.slane %v2047, 4
      %v2050 = vshll.u32 %v1821, 16
      %v2052 = vrot.slane %v2050, 5
      %v2053 = vor.u32 %v2049, %v2052
      %v2054 = vrot.slane %v2053, 4
      %v2056 = vshll.u32 %v1822, 16
      %v2058 = vrot.slane %v2056, 5
      %v2059 = vsel %vm284, %v2054, %v2058
      %v2060 = vshrl.u32 %v1822, 16
      %v2062 = vrot.slane %v2060, 4
      %v2063 = vor.u32 %v2062, %v2058
      %v2064 = vrot.slane %v2063, 4
      %v2066 = vshll.u32 %v1823, 16
      %v2068 = vrot.slane %v2066, 5
      %v2069 = vsel %vm284, %v2064, %v2068
      %v2071 = vshrl.u32 %v1824, 16
      %v2073 = vrot.slane %v2071, 4
      %v2074 = vshll.u32 %v1824, 16
      %v2076 = vrot.slane %v2074, 5
      %v2077 = vor.u32 %v2073, %v2076
      %v2078 = vrot.slane %v2077, 4
      %v2080 = vshll.u32 %v1825, 16
      %v2082 = vrot.slane %v2080, 5
      %v2083 = vsel %vm284, %v2078, %v2082
      %v2084 = vshrl.u32 %v1825, 16
      %v2086 = vrot.slane %v2084, 4
      %v2087 = vor.u32 %v2086, %v2082
      %v2088 = vrot.slane %v2087, 4
      %v2090 = vshll.u32 %v1826, 16
      %v2092 = vrot.slane %v2090, 5
      %v2093 = vsel %vm284, %v2088, %v2092
      %v2095 = vshrl.u32 %v1827, 16
      %v2097 = vrot.slane %v2095, 4
      %v2098 = vshll.u32 %v1827, 16
      %v2100 = vrot.slane %v2098, 5
      %v2101 = vor.u32 %v2097, %v2100
      %v2102 = vrot.slane %v2101, 4
      %v2104 = vshll.u32 %v1828, 16
      %v2106 = vrot.slane %v2104, 5
      %v2107 = vsel %vm284, %v2102, %v2106
      %v2108 = vshrl.u32 %v1828, 16
      %v2110 = vrot.slane %v2108, 4
      %v2111 = vor.u32 %v2110, %v2106
      %v2112 = vrot.slane %v2111, 4
      %v2114 = vshll.u32 %v1829, 16
      %v2116 = vrot.slane %v2114, 5
      %v2117 = vsel %vm284, %v2112, %v2116
      %v2119 = vshrl.u32 %v1830, 16
      %v2121 = vrot.slane %v2119, 4
      %v2122 = vshll.u32 %v1830, 16
      %v2124 = vrot.slane %v2122, 5
      %v2125 = vor.u32 %v2121, %v2124
      %v2126 = vrot.slane %v2125, 4
      %v2128 = vshll.u32 %v1831, 16
      %v2130 = vrot.slane %v2128, 5
      %v2131 = vsel %vm284, %v2126, %v2130
      %v2132 = vshrl.u32 %v1831, 16
      %v2134 = vrot.slane %v2132, 4
      %v2135 = vor.u32 %v2134, %v2130
      %v2136 = vrot.slane %v2135, 4
      %v2138 = vshll.u32 %v1832, 16
      %v2140 = vrot.slane %v2138, 5
      %v2141 = vsel %vm284, %v2136, %v2140
      %v2143 = vshrl.u32 %v1833, 16
      %v2145 = vrot.slane %v2143, 4
      %v2146 = vshll.u32 %v1833, 16
      %v2148 = vrot.slane %v2146, 5
      %v2149 = vor.u32 %v2145, %v2148
      %v2150 = vrot.slane %v2149, 4
      %v2152 = vshll.u32 %v1834, 16
      %v2154 = vrot.slane %v2152, 5
      %v2155 = vsel %vm284, %v2150, %v2154
      %v2156 = vshrl.u32 %v1834, 16
      %v2158 = vrot.slane %v2156, 4
      %v2159 = vor.u32 %v2158, %v2154
      %v2160 = vrot.slane %v2159, 4
      %v2162 = vshll.u32 %v1835, 16
      %v2164 = vrot.slane %v2162, 5
      %v2165 = vsel %vm284, %v2160, %v2164
      %v2167 = vshrl.u32 %v1836, 16
      %v2169 = vrot.slane %v2167, 4
      %v2170 = vshll.u32 %v1836, 16
      %v2172 = vrot.slane %v2170, 5
      %v2173 = vor.u32 %v2169, %v2172
      %v2174 = vrot.slane %v2173, 4
      %v2176 = vshll.u32 %v1837, 16
      %v2178 = vrot.slane %v2176, 5
      %v2179 = vsel %vm284, %v2174, %v2178
      %v2180 = vshrl.u32 %v1837, 16
      %v2182 = vrot.slane %v2180, 4
      %v2183 = vor.u32 %v2182, %v2178
      %v2184 = vrot.slane %v2183, 4
      %v2186 = vshll.u32 %v1838, 16
      %v2188 = vrot.slane %v2186, 5
      %v2189 = vsel %vm284, %v2184, %v2188
      %v2191 = vshrl.u32 %v1839, 16
      %v2193 = vrot.slane %v2191, 4
      %v2194 = vshll.u32 %v1839, 16
      %v2196 = vrot.slane %v2194, 5
      %v2197 = vor.u32 %v2193, %v2196
      %v2198 = vrot.slane %v2197, 4
      %v2200 = vshll.u32 %v1840, 16
      %v2202 = vrot.slane %v2200, 5
      %v2203 = vsel %vm284, %v2198, %v2202
      %v2204 = vshrl.u32 %v1840, 16
      %v2206 = vrot.slane %v2204, 4
      %v2207 = vor.u32 %v2206, %v2202
      %v2208 = vrot.slane %v2207, 4
      %v2210 = vshll.u32 %v1841, 16
      %v2212 = vrot.slane %v2210, 5
      %v2213 = vsel %vm284, %v2208, %v2212
      %v2214 = vunpack.c.l.b16 %v2035
      %v2215 = vunpack.c.l.b16 %v2045
      %v2216 = vunpack.c.l.b16 %v2059
      %v2217 = vunpack.c.l.b16 %v2069
      %v2218 = vunpack.c.l.b16 %v2083
      %v2219 = vunpack.c.l.b16 %v2093
      %v2220 = vunpack.c.l.b16 %v2107
      %v2221 = vunpack.c.l.b16 %v2117
      %v2222 = vunpack.c.l.b16 %v2131
      %v2223 = vunpack.c.l.b16 %v2141
      %v2224 = vunpack.c.l.b16 %v2155
      %v2225 = vunpack.c.l.b16 %v2165
      %v2226 = vunpack.c.l.b16 %v2179
      %v2227 = vunpack.c.l.b16 %v2189
      %v2228 = vunpack.c.l.b16 %v2203
      %v2229 = vunpack.c.l.b16 %v2213
      %v2230 = vpack.c.b16 %v2215, %v2214
      %v2231 = vpack.c.b16 %v2217, %v2216
      %v2232 = vpack.c.b16 %v2219, %v2218
      %v2233 = vpack.c.b16 %v2221, %v2220
      %v2234 = vpack.c.b16 %v2223, %v2222
      %v2235 = vpack.c.b16 %v2225, %v2224
      %v2236 = vpack.c.b16 %v2227, %v2226
      %v2237 = vpack.c.b16 %v2229, %v2228
      %v2239 = vsel %vm501, %v2230, 0
      %v2242 = vsel %vm501, %v2231, 0
      %v2245 = vsel %vm501, %v2232, 0
      %v2248 = vsel %vm501, %v2233, 0
      %v2251 = vsel %vm501, %v2234, 0
      %v2254 = vsel %vm501, %v2235, 0
      %v2257 = vsel %vm501, %v2236, 0
      %v2260 = vsel %vm501, %v2237, 0
      %v2263 = vsel %vm526, %v253, 0
      %2265 = vmatprep.subr.bf16.mxu0 0
      %2266 = vmatpush1.bf16.msra.mxu0 %v2263
      %2267 = vmatprep.subr.bf16.mxu0 0
      %2268 = vmatpush1.bf16.msra.mxu0 0
      %2269 = vmatprep.subr.bf16.mxu0 0
      %2270 = vmatpush1.bf16.msra.mxu0 0
      %2271 = vmatprep.subr.bf16.mxu0 0
      %2272 = vmatpush1.bf16.msra.mxu0 0
      %2273 = vmatprep.subr.bf16.mxu0 0
      %2274 = vmatpush1.bf16.msra.mxu0 0
      %2275 = vmatprep.subr.bf16.mxu0 0
      %2276 = vmatpush1.bf16.msra.mxu0 0
      %2277 = vmatprep.subr.bf16.mxu0 0
      %2278 = vmatpush1.bf16.msra.mxu0 0
      %2279 = vmatprep.subr.bf16.mxu0 0
      %2280 = vmatpush1.bf16.msra.mxu0 0
      %2281 = vmatprep.subr.bf16.mxu0 0
      %2282 = vmatpush1.bf16.msra.mxu0 0
      %2283 = vmatprep.subr.bf16.mxu0 0
      %2284 = vmatpush1.bf16.msra.mxu0 0
      %2285 = vmatprep.subr.bf16.mxu0 0
      %2286 = vmatpush1.bf16.msra.mxu0 0
      %2287 = vmatprep.subr.bf16.mxu0 0
      %2288 = vmatpush1.bf16.msra.mxu0 0
      %2289 = vmatprep.subr.bf16.mxu0 0
      %2290 = vmatpush1.bf16.msra.mxu0 0
      %2291 = vmatprep.subr.bf16.mxu0 0
      %2292 = vmatpush1.bf16.msra.mxu0 0
      %2293 = vmatprep.subr.bf16.mxu0 0
      %2294 = vmatpush1.bf16.msra.mxu0 0
      %2295 = vmatprep.subr.bf16.mxu0 0
      %2296 = vmatpush1.bf16.msra.mxu0 0
      %2297 = vmatprep.mubr.bf16.mxu0 0
      %2298 = vmatmul.mubr.bf16.gmra.mrb[0].mxu0 %v2239
      %v2299 = vpop.f32.mrb[0].mxu0
      %v2300 = vadd.f32 0.0, %v2299
      %v2301 = vpop.f32.mrb[0].mxu0
      %v2302 = vpop.f32.mrb[0].mxu0
      %v2303 = vadd.f32 0.0, %v2302
      %v2304 = vpop.f32.mrb[0].mxu0
      %2305 = vmatprep.mubr.bf16.mxu0 0
      %2306 = vmatmul.mubr.bf16.gmra.mrb[0].mxu0 %v2242
      %v2307 = vpop.f32.mrb[0].mxu0
      %v2308 = vadd.f32 0.0, %v2307
      %v2309 = vpop.f32.mrb[0].mxu0
      %v2310 = vpop.f32.mrb[0].mxu0
      %v2311 = vadd.f32 0.0, %v2310
      %v2312 = vpop.f32.mrb[0].mxu0
      %2313 = vmatprep.mubr.bf16.mxu0 0
      %2314 = vmatmul.mubr.bf16.gmra.mrb[0].mxu0 %v2245
      %v2315 = vpop.f32.mrb[0].mxu0
      %v2316 = vadd.f32 0.0, %v2315
      %v2317 = vpop.f32.mrb[0].mxu0
      %v2318 = vpop.f32.mrb[0].mxu0
      %v2319 = vadd.f32 0.0, %v2318
      %v2320 = vpop.f32.mrb[0].mxu0
      %2321 = vmatprep.mubr.bf16.mxu0 0
      %2322 = vmatmul.mubr.bf16.gmra.mrb[0].mxu0 %v2248
      %v2323 = vpop.f32.mrb[0].mxu0
      %v2324 = vadd.f32 0.0, %v2323
      %v2325 = vpop.f32.mrb[0].mxu0
      %v2326 = vpop.f32.mrb[0].mxu0
      %v2327 = vadd.f32 0.0, %v2326
      %v2328 = vpop.f32.mrb[0].mxu0
      %2329 = vmatprep.mubr.bf16.mxu0 0
      %2330 = vmatmul.mubr.bf16.gmra.mrb[0].mxu0 %v2251
      %v2331 = vpop.f32.mrb[0].mxu0
      %v2332 = vadd.f32 0.0, %v2331
      %v2333 = vpop.f32.mrb[0].mxu0
      %v2334 = vpop.f32.mrb[0].mxu0
      %v2335 = vadd.f32 0.0, %v2334
      %v2336 = vpop.f32.mrb[0].mxu0
      %2337 = vmatprep.mubr.bf16.mxu0 0
      %2338 = vmatmul.mubr.bf16.gmra.mrb[0].mxu0 %v2254
      %v2339 = vpop.f32.mrb[0].mxu0
      %v2340 = vadd.f32 0.0, %v2339
      %v2341 = vpop.f32.mrb[0].mxu0
      %v2342 = vpop.f32.mrb[0].mxu0
      %v2343 = vadd.f32 0.0, %v2342
      %v2344 = vpop.f32.mrb[0].mxu0
      %2345 = vmatprep.mubr.bf16.mxu0 0
      %2346 = vmatmul.mubr.bf16.gmra.mrb[0].mxu0 %v2257
      %v2347 = vpop.f32.mrb[0].mxu0
      %v2348 = vadd.f32 0.0, %v2347
      %v2349 = vpop.f32.mrb[0].mxu0
      %v2350 = vpop.f32.mrb[0].mxu0
      %v2351 = vadd.f32 0.0, %v2350
      %v2352 = vpop.f32.mrb[0].mxu0
      %2353 = vmatprep.mubr.bf16.mxu0 0
      %2354 = vmatmul.mubr.bf16.gmra.mrb[0].mxu0 %v2260
      %v2355 = vpop.f32.mrb[0].mxu0
      %v2356 = vadd.f32 0.0, %v2355
      %v2357 = vpop.f32.mrb[0].mxu0
      %v2358 = vpop.f32.mrb[0].mxu0
      %v2359 = vadd.f32 0.0, %v2358
      %v2360 = vpop.f32.mrb[0].mxu0
      %2361 = vdwg.mxu0
      %v2362 = vadd.f32 %v2006, %v2300
      %v2363 = vadd.f32 %v2007, %v2303
      %v2364 = vadd.f32 %v2008, %v2308
      %v2365 = vadd.f32 %v2009, %v2311
      %v2366 = vadd.f32 %v2010, %v2316
      %v2367 = vadd.f32 %v2011, %v2319
      %v2368 = vadd.f32 %v2012, %v2324
      %v2369 = vadd.f32 %v2013, %v2327
      %v2370 = vadd.f32 %v2014, %v2332
      %v2371 = vadd.f32 %v2015, %v2335
      %v2372 = vadd.f32 %v2016, %v2340
      %v2373 = vadd.f32 %v2017, %v2343
      %v2374 = vadd.f32 %v2018, %v2348
      %v2375 = vadd.f32 %v2019, %v2351
      %v2376 = vadd.f32 %v2020, %v2356
      %v2377 = vadd.f32 %v2021, %v2359
      %v2386 = vrot.slane %v1818, 5
      %v2387 = vrot.slane %v2386, 4
      %v2388 = vrot.slane %v1819, 5
      %v2389 = vsel %vm801, %v2387, %v2388
      %v2390 = vrot.slane %v2388, 4
      %v2391 = vrot.slane %v1820, 5
      %v2392 = vsel %vm801, %v2390, %v2391
      %v2393 = vrot.slane %v1821, 5
      %v2394 = vrot.slane %v2393, 4
      %v2395 = vrot.slane %v1822, 5
      %v2396 = vsel %vm801, %v2394, %v2395
      %v2397 = vrot.slane %v2395, 4
      %v2398 = vrot.slane %v1823, 5
      %v2399 = vsel %vm801, %v2397, %v2398
      %v2400 = vrot.slane %v1824, 5
      %v2401 = vrot.slane %v2400, 4
      %v2402 = vrot.slane %v1825, 5
      %v2403 = vsel %vm801, %v2401, %v2402
      %v2404 = vrot.slane %v2402, 4
      %v2405 = vrot.slane %v1826, 5
      %v2406 = vsel %vm801, %v2404, %v2405
      %v2407 = vrot.slane %v1827, 5
      %v2408 = vrot.slane %v2407, 4
      %v2409 = vrot.slane %v1828, 5
      %v2410 = vsel %vm801, %v2408, %v2409
      %v2411 = vrot.slane %v2409, 4
      %v2412 = vrot.slane %v1829, 5
      %v2413 = vsel %vm801, %v2411, %v2412
      %v2414 = vrot.slane %v1830, 5
      %v2415 = vrot.slane %v2414, 4
      %v2416 = vrot.slane %v1831, 5
      %v2417 = vsel %vm801, %v2415, %v2416
      %v2418 = vrot.slane %v2416, 4
      %v2419 = vrot.slane %v1832, 5
      %v2420 = vsel %vm801, %v2418, %v2419
      %v2421 = vrot.slane %v1833, 5
      %v2422 = vrot.slane %v2421, 4
      %v2423 = vrot.slane %v1834, 5
      %v2424 = vsel %vm801, %v2422, %v2423
      %v2425 = vrot.slane %v2423, 4
      %v2426 = vrot.slane %v1835, 5
      %v2427 = vsel %vm801, %v2425, %v2426
      %v2428 = vrot.slane %v1836, 5
      %v2429 = vrot.slane %v2428, 4
      %v2430 = vrot.slane %v1837, 5
      %v2431 = vsel %vm801, %v2429, %v2430
      %v2432 = vrot.slane %v2430, 4
      %v2433 = vrot.slane %v1838, 5
      %v2434 = vsel %vm801, %v2432, %v2433
      %v2435 = vrot.slane %v1839, 5
      %v2436 = vrot.slane %v2435, 4
      %v2437 = vrot.slane %v1840, 5
      %v2438 = vsel %vm801, %v2436, %v2437
      %v2439 = vrot.slane %v2437, 4
      %v2440 = vrot.slane %v1841, 5
      %v2441 = vsel %vm801, %v2439, %v2440
      %v2442 = vunpack.c.l.b16 %v2389
      %v2443 = vunpack.c.l.b16 %v2392
      %v2444 = vunpack.c.l.b16 %v2396
      %v2445 = vunpack.c.l.b16 %v2399
      %v2446 = vunpack.c.l.b16 %v2403
      %v2447 = vunpack.c.l.b16 %v2406
      %v2448 = vunpack.c.l.b16 %v2410
      %v2449 = vunpack.c.l.b16 %v2413
      %v2450 = vunpack.c.l.b16 %v2417
      %v2451 = vunpack.c.l.b16 %v2420
      %v2452 = vunpack.c.l.b16 %v2424
      %v2453 = vunpack.c.l.b16 %v2427
      %v2454 = vunpack.c.l.b16 %v2431
      %v2455 = vunpack.c.l.b16 %v2434
      %v2456 = vunpack.c.l.b16 %v2438
      %v2457 = vunpack.c.l.b16 %v2441
      %v2458 = vpack.c.b16 %v2443, %v2442
      %v2459 = vpack.c.b16 %v2445, %v2444
      %v2460 = vpack.c.b16 %v2447, %v2446
      %v2461 = vpack.c.b16 %v2449, %v2448
      %v2462 = vpack.c.b16 %v2451, %v2450
      %v2463 = vpack.c.b16 %v2453, %v2452
      %v2464 = vpack.c.b16 %v2455, %v2454
      %v2465 = vpack.c.b16 %v2457, %v2456
      %v2467 = vsel %vm501, %v2458, 0
      %v2470 = vsel %vm501, %v2459, 0
      %v2473 = vsel %vm501, %v2460, 0
      %v2476 = vsel %vm501, %v2461, 0
      %v2479 = vsel %vm501, %v2462, 0
      %v2482 = vsel %vm501, %v2463, 0
      %v2485 = vsel %vm501, %v2464, 0
      %v2488 = vsel %vm501, %v2465, 0
      %v2491 = vsel %vm526, %v254, 0
      %2493 = vmatprep.subr.bf16.mxu0 0
      %2494 = vmatpush1.bf16.msra.mxu0 %v2491
      %2495 = vmatprep.subr.bf16.mxu0 0
      %2496 = vmatpush1.bf16.msra.mxu0 0
      %2497 = vmatprep.subr.bf16.mxu0 0
      %2498 = vmatpush1.bf16.msra.mxu0 0
      %2499 = vmatprep.subr.bf16.mxu0 0
      %2500 = vmatpush1.bf16.msra.mxu0 0
      %2501 = vmatprep.subr.bf16.mxu0 0
      %2502 = vmatpush1.bf16.msra.mxu0 0
      %2503 = vmatprep.subr.bf16.mxu0 0
      %2504 = vmatpush1.bf16.msra.mxu0 0
      %2505 = vmatprep.subr.bf16.mxu0 0
      %2506 = vmatpush1.bf16.msra.mxu0 0
      %2507 = vmatprep.subr.bf16.mxu0 0
      %2508 = vmatpush1.bf16.msra.mxu0 0
      %2509 = vmatprep.subr.bf16.mxu0 0
      %2510 = vmatpush1.bf16.msra.mxu0 0
      %2511 = vmatprep.subr.bf16.mxu0 0
      %2512 = vmatpush1.bf16.msra.mxu0 0
      %2513 = vmatprep.subr.bf16.mxu0 0
      %2514 = vmatpush1.bf16.msra.mxu0 0
      %2515 = vmatprep.subr.bf16.mxu0 0
      %2516 = vmatpush1.bf16.msra.mxu0 0
      %2517 = vmatprep.subr.bf16.mxu0 0
      %2518 = vmatpush1.bf16.msra.mxu0 0
      %2519 = vmatprep.subr.bf16.mxu0 0
      %2520 = vmatpush1.bf16.msra.mxu0 0
      %2521 = vmatprep.subr.bf16.mxu0 0
      %2522 = vmatpush1.bf16.msra.mxu0 0
      %2523 = vmatprep.subr.bf16.mxu0 0
      %2524 = vmatpush1.bf16.msra.mxu0 0
      %2525 = vmatprep.mubr.bf16.mxu0 0
      %2526 = vmatmul.mubr.bf16.gmra.mrb[0].mxu0 %v2467
      %v2527 = vpop.f32.mrb[0].mxu0
      %v2528 = vadd.f32 0.0, %v2527
      %v2529 = vpop.f32.mrb[0].mxu0
      %v2530 = vpop.f32.mrb[0].mxu0
      %v2531 = vadd.f32 0.0, %v2530
      %v2532 = vpop.f32.mrb[0].mxu0
      %2533 = vmatprep.mubr.bf16.mxu0 0
      %2534 = vmatmul.mubr.bf16.gmra.mrb[0].mxu0 %v2470
      %v2535 = vpop.f32.mrb[0].mxu0
      %v2536 = vadd.f32 0.0, %v2535
      %v2537 = vpop.f32.mrb[0].mxu0
      %v2538 = vpop.f32.mrb[0].mxu0
      %v2539 = vadd.f32 0.0, %v2538
      %v2540 = vpop.f32.mrb[0].mxu0
      %2541 = vmatprep.mubr.bf16.mxu0 0
      %2542 = vmatmul.mubr.bf16.gmra.mrb[0].mxu0 %v2473
      %v2543 = vpop.f32.mrb[0].mxu0
      %v2544 = vadd.f32 0.0, %v2543
      %v2545 = vpop.f32.mrb[0].mxu0
      %v2546 = vpop.f32.mrb[0].mxu0
      %v2547 = vadd.f32 0.0, %v2546
      %v2548 = vpop.f32.mrb[0].mxu0
      %2549 = vmatprep.mubr.bf16.mxu0 0
      %2550 = vmatmul.mubr.bf16.gmra.mrb[0].mxu0 %v2476
      %v2551 = vpop.f32.mrb[0].mxu0
      %v2552 = vadd.f32 0.0, %v2551
      %v2553 = vpop.f32.mrb[0].mxu0
      %v2554 = vpop.f32.mrb[0].mxu0
      %v2555 = vadd.f32 0.0, %v2554
      %v2556 = vpop.f32.mrb[0].mxu0
      %2557 = vmatprep.mubr.bf16.mxu0 0
      %2558 = vmatmul.mubr.bf16.gmra.mrb[0].mxu0 %v2479
      %v2559 = vpop.f32.mrb[0].mxu0
      %v2560 = vadd.f32 0.0, %v2559
      %v2561 = vpop.f32.mrb[0].mxu0
      %v2562 = vpop.f32.mrb[0].mxu0
      %v2563 = vadd.f32 0.0, %v2562
      %v2564 = vpop.f32.mrb[0].mxu0
      %2565 = vmatprep.mubr.bf16.mxu0 0
      %2566 = vmatmul.mubr.bf16.gmra.mrb[0].mxu0 %v2482
      %v2567 = vpop.f32.mrb[0].mxu0
      %v2568 = vadd.f32 0.0, %v2567
      %v2569 = vpop.f32.mrb[0].mxu0
      %v2570 = vpop.f32.mrb[0].mxu0
      %v2571 = vadd.f32 0.0, %v2570
      %v2572 = vpop.f32.mrb[0].mxu0
      %2573 = vmatprep.mubr.bf16.mxu0 0
      %2574 = vmatmul.mubr.bf16.gmra.mrb[0].mxu0 %v2485
      %v2575 = vpop.f32.mrb[0].mxu0
      %v2576 = vadd.f32 0.0, %v2575
      %v2577 = vpop.f32.mrb[0].mxu0
      %v2578 = vpop.f32.mrb[0].mxu0
      %v2579 = vadd.f32 0.0, %v2578
      %v2580 = vpop.f32.mrb[0].mxu0
      %2581 = vmatprep.mubr.bf16.mxu0 0
      %2582 = vmatmul.mubr.bf16.gmra.mrb[0].mxu0 %v2488
      %v2583 = vpop.f32.mrb[0].mxu0
      %v2584 = vadd.f32 0.0, %v2583
      %v2585 = vpop.f32.mrb[0].mxu0
      %v2586 = vpop.f32.mrb[0].mxu0
      %v2587 = vadd.f32 0.0, %v2586
      %v2588 = vpop.f32.mrb[0].mxu0
      %2589 = vdwg.mxu0
      %v2590 = vadd.f32 %v2362, %v2528
      %v2591 = vadd.f32 %v2363, %v2531
      %v2592 = vadd.f32 %v2364, %v2536
      %v2593 = vadd.f32 %v2365, %v2539
      %v2594 = vadd.f32 %v2366, %v2544
      %v2595 = vadd.f32 %v2367, %v2547
      %v2596 = vadd.f32 %v2368, %v2552
      %v2597 = vadd.f32 %v2369, %v2555
      %v2598 = vadd.f32 %v2370, %v2560
      %v2599 = vadd.f32 %v2371, %v2563
      %v2600 = vadd.f32 %v2372, %v2568
      %v2601 = vadd.f32 %v2373, %v2571
      %v2602 = vadd.f32 %v2374, %v2576
      %v2603 = vadd.f32 %v2375, %v2579
      %v2604 = vadd.f32 %v2376, %v2584
      %v2605 = vadd.f32 %v2377, %v2587
      %v2606 = vld [vmem:[%s2] sm:$0x1]
      %v2608 = vlaneseq
      %v2609 = vshrl.u32 %v2608, 7
      %v2610 = vsub.s32 0, %v2609
      %v2611 = vrot.slane %v2606, %v2610
      %v2613 = vadd.f32 %v2590, %v2611
      %v2614 = vadd.f32 %v2591, %v2611
      %v2615 = vadd.f32 %v2592, %v2611
      %v2616 = vadd.f32 %v2593, %v2611
      %v2617 = vadd.f32 %v2594, %v2611
      %v2618 = vadd.f32 %v2595, %v2611
      %v2619 = vadd.f32 %v2596, %v2611
      %v2620 = vadd.f32 %v2597, %v2611
      %v2621 = vadd.f32 %v2598, %v2611
      %v2622 = vadd.f32 %v2599, %v2611
      %v2623 = vadd.f32 %v2600, %v2611
      %v2624 = vadd.f32 %v2601, %v2611
      %v2625 = vadd.f32 %v2602, %v2611
      %v2626 = vadd.f32 %v2603, %v2611
      %v2627 = vadd.f32 %v2604, %v2611
      %v2628 = vadd.f32 %v2605, %v2611
      %vm2629 = vcmask 64512
      %v2630 = vsel %vm2629, %v2613, 0.0
      %v2631 = vsel %vm2629, %v2614, 0.0
      %v2632 = vadd.f32 %v2630, %v2631
      %v2633 = vsel %vm2629, %v2615, 0.0
      %v2634 = vadd.f32 %v2632, %v2633
      %v2635 = vsel %vm2629, %v2616, 0.0
      %v2636 = vadd.f32 %v2634, %v2635
      %v2637 = vsel %vm2629, %v2617, 0.0
      %v2638 = vadd.f32 %v2636, %v2637
      %v2639 = vsel %vm2629, %v2618, 0.0
      %v2640 = vadd.f32 %v2638, %v2639
      %v2641 = vsel %vm2629, %v2619, 0.0
      %v2642 = vadd.f32 %v2640, %v2641
      %v2643 = vsel %vm2629, %v2620, 0.0
      %v2644 = vadd.f32 %v2642, %v2643
      %v2645 = vsel %vm2629, %v2621, 0.0
      %v2646 = vadd.f32 %v2644, %v2645
      %v2647 = vsel %vm2629, %v2622, 0.0
      %v2648 = vadd.f32 %v2646, %v2647
      %v2649 = vsel %vm2629, %v2623, 0.0
      %v2650 = vadd.f32 %v2648, %v2649
      %v2651 = vsel %vm2629, %v2624, 0.0
      %v2652 = vadd.f32 %v2650, %v2651
      %v2653 = vsel %vm2629, %v2625, 0.0
      %v2654 = vadd.f32 %v2652, %v2653
      %v2655 = vsel %vm2629, %v2626, 0.0
      %v2656 = vadd.f32 %v2654, %v2655
      %v2657 = vsel %vm2629, %v2627, 0.0
      %v2658 = vadd.f32 %v2656, %v2657
      %v2659 = vsel %vm2629, %v2628, 0.0
      %v2660 = vadd.f32 %v2658, %v2659
      %v2661 = vrot.slane %v2660, 4
      %v2662 = vadd.f32 %v2660, %v2661
      %v2663 = vrot.slane %v2662, 2
      %v2664 = vadd.f32 %v2662, %v2663
      %v2665 = vrot.slane %v2664, 1
      %v2666 = vadd.f32 %v2664, %v2665
      %v2667 = vmul.f32 %v2613, %v2613
      %v2668 = vmul.f32 %v2614, %v2614
      %v2669 = vmul.f32 %v2615, %v2615
      %v2670 = vmul.f32 %v2616, %v2616
      %v2671 = vmul.f32 %v2617, %v2617
      %v2672 = vmul.f32 %v2618, %v2618
      %v2673 = vmul.f32 %v2619, %v2619
      %v2674 = vmul.f32 %v2620, %v2620
      %v2675 = vmul.f32 %v2621, %v2621
      %v2676 = vmul.f32 %v2622, %v2622
      %v2677 = vmul.f32 %v2623, %v2623
      %v2678 = vmul.f32 %v2624, %v2624
      %v2679 = vmul.f32 %v2625, %v2625
      %v2680 = vmul.f32 %v2626, %v2626
      %v2681 = vmul.f32 %v2627, %v2627
      %v2682 = vmul.f32 %v2628, %v2628
      %v2683 = vsel %vm2629, %v2667, 0.0
      %v2684 = vsel %vm2629, %v2668, 0.0
      %v2685 = vadd.f32 %v2683, %v2684
      %v2686 = vsel %vm2629, %v2669, 0.0
      %v2687 = vadd.f32 %v2685, %v2686
      %v2688 = vsel %vm2629, %v2670, 0.0
      %v2689 = vadd.f32 %v2687, %v2688
      %v2690 = vsel %vm2629, %v2671, 0.0
      %v2691 = vadd.f32 %v2689, %v2690
      %v2692 = vsel %vm2629, %v2672, 0.0
      %v2693 = vadd.f32 %v2691, %v2692
      %v2694 = vsel %vm2629, %v2673, 0.0
      %v2695 = vadd.f32 %v2693, %v2694
      %v2696 = vsel %vm2629, %v2674, 0.0
      %v2697 = vadd.f32 %v2695, %v2696
      %v2698 = vsel %vm2629, %v2675, 0.0
      %v2699 = vadd.f32 %v2697, %v2698
      %v2700 = vsel %vm2629, %v2676, 0.0
      %v2701 = vadd.f32 %v2699, %v2700
      %v2702 = vsel %vm2629, %v2677, 0.0
      %v2703 = vadd.f32 %v2701, %v2702
      %v2704 = vsel %vm2629, %v2678, 0.0
      %v2705 = vadd.f32 %v2703, %v2704
      %v2706 = vsel %vm2629, %v2679, 0.0
      %v2707 = vadd.f32 %v2705, %v2706
      %v2708 = vsel %vm2629, %v2680, 0.0
      %v2709 = vadd.f32 %v2707, %v2708
      %v2710 = vsel %vm2629, %v2681, 0.0
      %v2711 = vadd.f32 %v2709, %v2710
      %v2712 = vsel %vm2629, %v2682, 0.0
      %v2713 = vadd.f32 %v2711, %v2712
      %v2714 = vrot.slane %v2713, 4
      %v2715 = vadd.f32 %v2713, %v2714
      %v2716 = vrot.slane %v2715, 2
      %v2717 = vadd.f32 %v2715, %v2716
      %v2718 = vrot.slane %v2717, 1
      %v2719 = vadd.f32 %v2717, %v2718
      %vm2720 = vcmask 57344
      %2721 = vst.msk [vmem:[%s241] sm:$0x1] %vm2720, %v2666
      %2722 = vst.msk [vmem:[%s241 + $0x1] sm:$0x1] %vm2720, %v2719
      %2723 = vst.msk [vmem:[%s232] sm:$0xff] %vm2629, %v2613
      %2724 = vst.msk [vmem:[%s232 + $0x8] sm:$0xff] %vm2629, %v2614
      %2725 = vst.msk [vmem:[%s232 + $0x10] sm:$0xff] %vm2629, %v2615
      %2726 = vst.msk [vmem:[%s232 + $0x18] sm:$0xff] %vm2629, %v2616
      %2727 = vst.msk [vmem:[%s232 + $0x20] sm:$0xff] %vm2629, %v2617
      %2728 = vst.msk [vmem:[%s232 + $0x28] sm:$0xff] %vm2629, %v2618
      %2729 = vst.msk [vmem:[%s232 + $0x30] sm:$0xff] %vm2629, %v2619
      %2730 = vst.msk [vmem:[%s232 + $0x38] sm:$0xff] %vm2629, %v2620
      %2731 = vst.msk [vmem:[%s232 + $0x40] sm:$0xff] %vm2629, %v2621
      %2732 = vst.msk [vmem:[%s232 + $0x48] sm:$0xff] %vm2629, %v2622
      %2733 = vst.msk [vmem:[%s232 + $0x50] sm:$0xff] %vm2629, %v2623
      %2734 = vst.msk [vmem:[%s232 + $0x58] sm:$0xff] %vm2629, %v2624
      %2735 = vst.msk [vmem:[%s232 + $0x60] sm:$0xff] %vm2629, %v2625
      %2736 = vst.msk [vmem:[%s232 + $0x68] sm:$0xff] %vm2629, %v2626
      %2737 = vst.msk [vmem:[%s232 + $0x70] sm:$0xff] %vm2629, %v2627
      %2738 = vst.msk [vmem:[%s232 + $0x78] sm:$0xff] %vm2629, %v2628
      %s2739 = smul.u32 %s20, 2
      %s2740 = sadd.s32 %s2739, %s21
      %s2741 = smul.u32 8, %s2740
      %p2742 = scmp.lt.s32.totalorder %s2741, 31
      %s2743 = scalar_select %p2742, %s2741, 31
      %s2744 = smul.addr %s2743, 2
      %s2745 = smul.addr %s2744, 8
      %s2746 = scalar_lea.vmem %s3, %s2745
      %s2747 = smul.u32 %s20, 2
      %s2748 = sadd.s32 %s2747, %s21
      %p2749 = scmp.lt.s32.totalorder %s2748, 3
      %s2750 = scalar_select %p2749, %s2748, 3
      %s2751 = smul.addr %s2750, 2
      %s2752 = scalar_lea.vmem %s4, %s2751
      // Predicated region
      $region33: #{cnn_unit_forward.2} parent=31 // pred_check
        %p2753 = pneg %p118
      $region34: #{cnn_unit_forward.2} parent=31 // pred_check_branch
        %2755 = sbr.rel (%p2753) target = $region36
      $region35: #{cnn_unit_forward.2} parent=31 // pred_region
        %s2756 = smul.u32 %s20, 2
        %s2757 = sadd.s32 %s2756, %s21
        %s2758 = smul.u32 8, %s2757
      $region36: #{cnn_unit_forward.2} parent=31 // pred_fallthru
        _
      // Predicated region
      $region37: #{cnn_unit_forward.2} parent=31 // pred_check
        %p2759 = pneg %p148
      $region38: #{cnn_unit_forward.2} parent=31 // pred_check_branch
        %2761 = sbr.rel (%p2759) target = $region40
      $region39: #{cnn_unit_forward.2} parent=31 // pred_region
        %s2762 = smul.u32 %s20, 2
        %s2763 = sadd.s32 %s2762, %s21
      $region40: #{cnn_unit_forward.2} parent=31 // pred_fallthru
        _
    $region32: #{cnn_unit_forward.2} parent=5 // pred_fallthru
      _
    %p2764 = scmp.le.s32.totalorder 2, %s11
    // Predicated region
    $region41: #{cnn_unit_forward.2} parent=5 // pred_check
      %p2765 = pneg %p2764
    $region42: #{cnn_unit_forward.2} parent=5 // pred_check_branch
      %2767 = sbr.rel (%p2765) target = $region44
    $region43: #{cnn_unit_forward.2} parent=5 // pred_region
      %s2768 = ssub.s32 %s11, 2
      // Predicated region
      $region45: #{cnn_unit_forward.2} parent=43 // pred_check
        %p2769 = pneg %p124
      $region46: #{cnn_unit_forward.2} parent=43 // pred_check_branch
        %2771 = sbr.rel (%p2769) target = $region48
      $region47: #{cnn_unit_forward.2} parent=43 // pred_region
        %s2772 = smul.u32 %s22, 2
        %s2773 = sadd.s32 %s2772, %s23
        %s2774 = smul.u32 8, %s2773
        %p2775 = scmp.lt.s32.totalorder %s2774, 31
        %s2776 = scalar_select %p2775, %s2774, 31
        %s2777 = smul.addr %s2776, 2
        %s2778 = smul.addr %s2777, 8
        %s2779 = scalar_lea.vmem %s3, %s2778
      $region48: #{cnn_unit_forward.2} parent=43 // pred_fallthru
        _
      // Predicated region
      $region49: #{cnn_unit_forward.2} parent=43 // pred_check
        %p2780 = pneg %p154
      $region50: #{cnn_unit_forward.2} parent=43 // pred_check_branch
        %2782 = sbr.rel (%p2780) target = $region52
      $region51: #{cnn_unit_forward.2} parent=43 // pred_region
        %s2783 = smul.u32 %s22, 2
        %s2784 = sadd.s32 %s2783, %s23
        %p2785 = scmp.lt.s32.totalorder %s2784, 3
        %s2786 = scalar_select %p2785, %s2784, 3
        %s2787 = smul.addr %s2786, 2
        %s2788 = scalar_lea.vmem %s4, %s2787
      $region52: #{cnn_unit_forward.2} parent=43 // pred_fallthru
        _
    $region44: #{cnn_unit_forward.2} parent=5 // pred_fallthru
      _
  $region6: #{cnn_unit_forward.2} parent=0 // loop_footer
    %s15 = sadd.s32 1, %s11
  $region7: #{cnn_unit_forward.2} parent=0 // loop_footer_branch
    %10 = sbr.rel target = $region3
  $region8: #{cnn_unit_forward.2} parent=0 // loop_exit
    _

</llo_original>
